<compile_context>
chip_gen: v5e
topology: v5e:2x2
jax: 0.10.0
libtpu: 0.0.40
codegen_flags: <defaults>
</compile_context>

<pallas_src>
import functools
import math

import jax
import jax.numpy as jnp
from jax import lax
from jax.experimental import pallas as pl
from jax.experimental.pallas import tpu as pltpu


def _detect_vmem_limit():
    """Per-generation VMEM budget: ~96 MiB on 128-MiB parts (v5e/v6e),
    ~36 MiB on 64-MiB parts (v7x). Falls back to a safe 48 MiB."""
    try:
        phys = int(pltpu.get_tpu_info().vmem_capacity_bytes)
    except Exception:
        return 48 * 1024 * 1024
    if phys >= 128 * 1024 * 1024:
        return 96 * 1024 * 1024
    return 36 * 1024 * 1024


_VMEM_LIMIT = _detect_vmem_limit()
_BIG_VMEM = _VMEM_LIMIT >= 64 * 1024 * 1024


def _pick_tile(dim, target, aligns):
    """Largest tile <= target dividing dim, preferring the largest alignment in
    `aligns` (256-multiples fill the 256-wide MXU on v6e/v7x). Falls back to
    the full dimension (always a legal block)."""
    if dim <= target:
        return dim
    for align in aligns:
        t = (target // align) * align
        while t >= align:
            if dim % t == 0:
                return t
            t -= align
    return dim


def _gelu(y):
    # tanh-approximate GELU (f32 math).
    # TODO(synk): erf-based GELU for exact HF BertModel parity.
    c = jnp.float32(math.sqrt(2.0 / math.pi))
    return 0.5 * y * (1.0 + jnp.tanh(c * (y + 0.044715 * y * y * y)))


# ----------------------------- dense (matmul) -------------------------------

def _dense_kernel(x_ref, w_ref, b_ref, *rest, activation):
    if len(rest) == 3:
        r_ref, o_ref, acc_ref = rest          # residual fused into the epilogue
    else:
        r_ref = None
        o_ref, acc_ref = rest

    @pl.when(pl.program_id(2) == 0)
    def _init():
        acc_ref[...] = jnp.zeros_like(acc_ref)

    # bf16 MXU operands (activations arrive bf16 already), f32 accumulation.
    acc_ref[...] += jnp.dot(x_ref[...], w_ref[...],
                            preferred_element_type=jnp.float32)

    @pl.when(pl.program_id(2) == pl.num_programs(2) - 1)
    def _finish():
        y = acc_ref[...] + b_ref[...]
        if activation == "gelu":
            y = _gelu(y)
        elif activation == "tanh":
            y = jnp.tanh(y)
        if r_ref is not None:
            y = y + r_ref[...].astype(jnp.float32)
        o_ref[...] = y.astype(o_ref.dtype)


def dense(x, w, b, activation=None, residual=None, out_dtype=jnp.bfloat16,
          tm=None, tn=None, tk=None):
    """y = act(x @ w + b) [+ residual]; x bf16 (M,K), w bf16 (K,N), b f32 (N,)."""
    M, K = x.shape
    K2, N = w.shape
    assert K == K2
    tm = _pick_tile(M, tm or (512 if _BIG_VMEM else 256), (256, 128, 8))
    tn = _pick_tile(N, tn or (1024 if _BIG_VMEM else 512), (256, 128))
    tk = _pick_tile(K, tk or 512, (256, 128))

    in_specs = [
        pl.BlockSpec((tm, tk), lambda i, j, k: (i, k)),
        pl.BlockSpec((tk, tn), lambda i, j, k: (k, j)),
        pl.BlockSpec((1, tn), lambda i, j, k: (0, j)),
    ]
    args = [x, w, b.reshape(1, N)]
    if residual is not None:
        in_specs.append(pl.BlockSpec((tm, tn), lambda i, j, k: (i, j)))
        args.append(residual)

    kernel = functools.partial(_dense_kernel, activation=activation)
    return pl.pallas_call(
        kernel,
        out_shape=jax.ShapeDtypeStruct((M, N), out_dtype),
        grid=(M // tm, N // tn, K // tk),
        in_specs=in_specs,
        out_specs=pl.BlockSpec((tm, tn), lambda i, j, k: (i, j)),
        scratch_shapes=[pltpu.VMEM((tm, tn), jnp.float32)],
        compiler_params=pltpu.CompilerParams(
            dimension_semantics=("parallel", "parallel", "arbitrary"),
            vmem_limit_bytes=_VMEM_LIMIT),
    )(*args)


# ------------------------------ fused FFN ------------------------------------

def _ffn_kernel(x_ref, w1_ref, b1_ref, w2_ref, b2_ref, r_ref, o_ref, acc_ref):
    @pl.when(pl.program_id(1) == 0)
    def _init():
        acc_ref[...] = jnp.zeros_like(acc_ref)

    h = jnp.dot(x_ref[...], w1_ref[...], preferred_element_type=jnp.float32)
    h = _gelu(h + b1_ref[...])                       # (tm, tki) stays in VMEM
    acc_ref[...] += jnp.dot(h.astype(jnp.bfloat16), w2_ref[...],
                            preferred_element_type=jnp.float32)

    @pl.when(pl.program_id(1) == pl.num_programs(1) - 1)
    def _finish():
        y = acc_ref[...] + b2_ref[...] + r_ref[...].astype(jnp.float32)
        o_ref[...] = y.astype(o_ref.dtype)


def ffn(x, w1, b1, w2, b2, residual, out_dtype=jnp.bfloat16, tm=None, tki=None):
    """Fused feed-forward: gelu(x@w1+b1) @ w2 + b2 + residual.

    The (tm, inter) intermediate never leaves VMEM (no HBM round-trip)."""
    M, H = x.shape
    H2, inter = w1.shape
    assert H == H2 and w2.shape == (inter, H)
    tm = _pick_tile(M, tm or (512 if _BIG_VMEM else 256), (256, 128, 8))
    tki = _pick_tile(inter, tki or 512, (256, 128))
    return pl.pallas_call(
        _ffn_kernel,
        out_shape=jax.ShapeDtypeStruct((M, H), out_dtype),
        grid=(M // tm, inter // tki),
        in_specs=[
            pl.BlockSpec((tm, H), lambda i, j: (i, 0)),
            pl.BlockSpec((H, tki), lambda i, j: (0, j)),
            pl.BlockSpec((1, tki), lambda i, j: (0, j)),
            pl.BlockSpec((tki, H), lambda i, j: (j, 0)),
            pl.BlockSpec((1, H), lambda i, j: (0, 0)),
            pl.BlockSpec((tm, H), lambda i, j: (i, 0)),
        ],
        out_specs=pl.BlockSpec((tm, H), lambda i, j: (i, 0)),
        scratch_shapes=[pltpu.VMEM((tm, H), jnp.float32)],
        compiler_params=pltpu.CompilerParams(
            dimension_semantics=("parallel", "arbitrary"),
            vmem_limit_bytes=_VMEM_LIMIT),
    )(x, w1, b1.reshape(1, inter), w2, b2.reshape(1, H), residual)


# -------------------------------- layernorm ----------------------------------

def _ln_kernel(x_ref, g_ref, b_ref, o_ref, *, eps):
    x = x_ref[...].astype(jnp.float32)       # bf16 (or f32) in, f32 math
    mu = jnp.mean(x, axis=-1, keepdims=True)
    var = jnp.mean(jnp.square(x - mu), axis=-1, keepdims=True)
    y = (x - mu) * lax.rsqrt(var + eps) * g_ref[...] + b_ref[...]
    o_ref[...] = y.astype(o_ref.dtype)


def layernorm(x, gamma, beta, *, eps=1e-12, out_dtype=jnp.bfloat16, tm=None):
    """LayerNorm over the last axis, row-tiled; emits bf16 by default."""
    M, H = x.shape
    tm = _pick_tile(M, tm or (512 if _BIG_VMEM else 256), (256, 128, 8))
    row_spec = pl.BlockSpec((tm, H), lambda i: (i, 0))
    vec_spec = pl.BlockSpec((1, H), lambda i: (0, 0))
    return pl.pallas_call(
        functools.partial(_ln_kernel, eps=eps),
        out_shape=jax.ShapeDtypeStruct((M, H), out_dtype),
        grid=(M // tm,),
        in_specs=[row_spec, vec_spec, vec_spec],
        out_specs=row_spec,
        compiler_params=pltpu.CompilerParams(
            dimension_semantics=("parallel",),
            vmem_limit_bytes=_VMEM_LIMIT),
    )(x, gamma.reshape(1, H), beta.reshape(1, H))


# -------------------------------- attention ----------------------------------

def _mha_heads(q, k, v, acc_ref, *, heads, dh):
    """q/k/v: (S, heads*dh) bf16 values. Each head's (S, dh) context is written
    into the f32 VMEM scratch as it is produced (no concat, no spill-heavy
    live ranges across the unrolled head loop)."""
    for h in range(heads):
        sl = slice(h * dh, (h + 1) * dh)
        # q.k^T without an in-kernel transpose; 1/sqrt(Dh) is folded into w_qkv.
        s = lax.dot_general(q[:, sl], k[:, sl], (((1,), (1,)), ((), ())),
                            preferred_element_type=jnp.float32)        # (S, S)
        m = jnp.max(s, axis=-1, keepdims=True)
        p = jnp.exp(s - m)
        p = p * pl.reciprocal(jnp.sum(p, axis=-1, keepdims=True), approx=True)
        acc_ref[:, sl] = jnp.dot(p.astype(jnp.bfloat16), v[:, sl],
                                 preferred_element_type=jnp.float32)    # (S, dh)


def _attn_kernel_grouped(q_ref, k_ref, v_ref, o_ref, acc_ref, *, heads, dh):
    _mha_heads(q_ref[0], k_ref[0], v_ref[0], acc_ref, heads=heads, dh=dh)
    o_ref[0] = acc_ref[...].astype(o_ref.dtype)      # single lane-dense store


def _attn_kernel_packed(qkv_ref, o_ref, acc_ref, *, heads, dh):
    hidden = heads * dh
    qkv = qkv_ref[0]                                  # (S, 3H) packed [q | k | v]
    _mha_heads(qkv[:, :hidden], qkv[:, hidden:2 * hidden], qkv[:, 2 * hidden:],
               acc_ref, heads=heads, dh=dh)
    o_ref[0] = acc_ref[...].astype(o_ref.dtype)


def attention(qkv, heads):
    """qkv: (B, S, 3H) bf16 packed [q|k|v]; returns (B, S, H) bf16 context.

    Full (all-ones) attention mask, matching BertModel(tokens, token_type_ids=...)
    with no attention_mask supplied.
    """
    B, S, H3 = qkv.shape
    H = H3 // 3
    dh = H // heads

    # Smallest head group whose width is a multiple of 128 lanes (e.g. 2 heads
    # of Dh=64 for BERT-base): lane-aligned q/k/v blocks, smaller per-step
    # vreg/VMEM footprint, and more parallel grid steps (helps v7x's 2 TCs).
    hpg = 0
    for cand in range(1, heads + 1):
        if heads % cand == 0 and (cand * dh) % 128 == 0:
            hpg = cand
            break

    if hpg:
        grp = hpg * dh
        nb = H // grp                     # q/k/v offsets of the packed 3H axis, in blocks

        def q_map(b, g):
            return (b, 0, g)

        def k_map(b, g):
            return (b, 0, nb + g)

        def v_map(b, g):
            return (b, 0, 2 * nb + g)

        kernel = functools.partial(_attn_kernel_grouped, heads=hpg, dh=dh)
        return pl.pallas_call(
            kernel,
            out_shape=jax.ShapeDtypeStruct((B, S, H), jnp.bfloat16),
            grid=(B, nb),
            in_specs=[
                pl.BlockSpec((1, S, grp), q_map),
                pl.BlockSpec((1, S, grp), k_map),
                pl.BlockSpec((1, S, grp), v_map),
            ],
            out_specs=pl.BlockSpec((1, S, grp), q_map),
            scratch_shapes=[pltpu.VMEM((S, grp), jnp.float32)],
            compiler_params=pltpu.CompilerParams(
                dimension_semantics=("parallel", "parallel"),
                vmem_limit_bytes=_VMEM_LIMIT),
        )(qkv, qkv, qkv)

    # Fallback for head widths that cannot form 128-lane groups: one packed
    # (S, 3H) block per batch element.
    # TODO(synk): S-tiled online-softmax (flash) path for long sequences
    # (needed earliest on v7x's 64 MiB VMEM).
    kernel = functools.partial(_attn_kernel_packed, heads=heads, dh=dh)
    return pl.pallas_call(
        kernel,
        out_shape=jax.ShapeDtypeStruct((B, S, H), jnp.bfloat16),
        grid=(B,),
        in_specs=[pl.BlockSpec((1, S, H3), lambda b: (b, 0, 0))],
        out_specs=pl.BlockSpec((1, S, H), lambda b: (b, 0, 0)),
        scratch_shapes=[pltpu.VMEM((S, H), jnp.float32)],
        compiler_params=pltpu.CompilerParams(
            dimension_semantics=("parallel",),
            vmem_limit_bytes=_VMEM_LIMIT),
    )(qkv)


# --------------------------- parameter creation -----------------------------

def init_bert_params(key, *, vocab, max_pos, type_vocab, hidden, inter,
                     layers, heads):
    std = 0.02
    dh = hidden // heads
    scale = 1.0 / math.sqrt(dh)
    keys = jax.random.split(key, 4 + layers)

    def w(k, shape):
        return std * jax.random.normal(k, shape, dtype=jnp.float32)

    params = {
        "word_emb": w(keys[0], (vocab, hidden)),
        "pos_emb": w(keys[1], (max_pos, hidden)),
        "type_emb": w(keys[2], (type_vocab, hidden)),
        "emb_ln_g": jnp.ones((hidden,), jnp.float32),
        "emb_ln_b": jnp.zeros((hidden,), jnp.float32),
        "pool_w": w(keys[3], (hidden, hidden)).astype(jnp.bfloat16),
        "pool_b": jnp.zeros((hidden,), jnp.float32),
        "layers": [],
    }
    for li in range(layers):
        lk = jax.random.split(keys[4 + li], 4)
        # Fused QKV weight [H, 3H] = [wq | wk | wv]; the 1/sqrt(Dh) softmax
        # scale is folded into the Q columns (and would be folded into the Q
        # bias if it were nonzero), so the attention kernel never rescales.
        w_qkv = w(lk[0], (hidden, 3 * hidden))
        w_qkv = w_qkv.at[:, :hidden].multiply(scale)
        layer = {
            "w_qkv": w_qkv.astype(jnp.bfloat16),
            "b_qkv": jnp.zeros((3 * hidden,), jnp.float32),
            "wo": w(lk[1], (hidden, hidden)).astype(jnp.bfloat16),
            "bo": jnp.zeros((hidden,), jnp.float32),
            "ln1_g": jnp.ones((hidden,), jnp.float32),
            "ln1_b": jnp.zeros((hidden,), jnp.float32),
            "w1": w(lk[2], (hidden, inter)).astype(jnp.bfloat16),
            "b1": jnp.zeros((inter,), jnp.float32),
            "w2": w(lk[3], (inter, hidden)).astype(jnp.bfloat16),
            "b2": jnp.zeros((hidden,), jnp.float32),
            "ln2_g": jnp.ones((hidden,), jnp.float32),
            "ln2_b": jnp.zeros((hidden,), jnp.float32),
        }
        params["layers"].append(layer)
    return params


# ------------------------------ BERT forward --------------------------------

def chat_model_forward(params, tokens, segments, *, heads):
    """Equivalent of ChatModel.forward: BertModel(tokens, token_type_ids=segments).

    Returns (last_hidden_state [B,S,H] f32, pooled_output [B,H] f32).
    """
    B, S = tokens.shape
    H = params["word_emb"].shape[1]

    # Embedding lookups stay in XLA glue.
    # TODO(synk): DMA-gather kernel for the embedding lookup.
    pos_ids = jnp.arange(S)
    emb = (params["word_emb"][tokens]
           + params["pos_emb"][pos_ids][None, :, :]
           + params["type_emb"][segments])
    x = layernorm(emb.reshape(B * S, H), params["emb_ln_g"], params["emb_ln_b"])

    for layer in params["layers"]:
        # Fused QKV projection -> (B, S, 3H); reshape only, no transposes.
        qkv = dense(x, layer["w_qkv"], layer["b_qkv"]).reshape(B, S, 3 * H)
        ctx = attention(qkv, heads).reshape(B * S, H)
        # Output projection with the residual add fused into its epilogue,
        # so LayerNorm reads a single tensor.
        attn_out = dense(ctx, layer["wo"], layer["bo"], residual=x)
        x = layernorm(attn_out, layer["ln1_g"], layer["ln1_b"])

        # Fused FFN (matmul -> GELU -> matmul -> +bias +residual); the
        # (M, inter) intermediate never touches HBM.
        ff = ffn(x, layer["w1"], layer["b1"], layer["w2"], layer["b2"],
                 residual=x)
        x = layernorm(ff, layer["ln2_g"], layer["ln2_b"])

    last_hidden = x.reshape(B, S, H).astype(jnp.float32)
    pooled = dense(x.reshape(B, S, H)[:, 0, :], params["pool_w"],
                   params["pool_b"], activation="tanh", out_dtype=jnp.float32)
    return last_hidden, pooled


# ---------------------------------- main -------------------------------------

if __name__ == "__main__":
    def run(*, B, S, hidden, heads, inter, layers,
            vocab=100, max_pos=16, type_vocab=2):
        key = jax.random.PRNGKey(0)
        k_params, k_tok = jax.random.split(key)
        params = init_bert_params(
            k_params, vocab=vocab, max_pos=max_pos, type_vocab=type_vocab,
            hidden=hidden, inter=inter, layers=layers, heads=heads)
        tokens = jax.random.randint(k_tok, (B, S), 0, vocab, dtype=jnp.int32)
        segments = jnp.concatenate(
            [jnp.zeros((B, S // 2), jnp.int32), jnp.ones((B, S // 2), jnp.int32)],
            axis=1)
        fwd = jax.jit(functools.partial(chat_model_forward, heads=heads))
        last_hidden, pooled = fwd(params, tokens, segments)
        jax.block_until_ready((last_hidden, pooled))
        assert last_hidden.shape == (B, S, hidden)
        assert pooled.shape == (B, hidden)
        assert jnp.all(jnp.isfinite(last_hidden)) and jnp.all(jnp.isfinite(pooled))

    # Small BERT-shaped config (exercises the packed-attention fallback path).
    run(B=2, S=8, hidden=32, heads=4, inter=64, layers=2)
    # Dh=64 config (exercises the lane-aligned grouped attention path used at
    # BERT-base scale: H=768, 12 heads, Dh=64).
    run(B=2, S=8, hidden=256, heads=4, inter=512, layers=1)

    print("KERNEL_OK")
</pallas_src>

<mosaic_0001>
module attributes {stable_mosaic.version = 11 : i64} {
  func.func @_ln_kernel(%arg0: i32, %arg1: memref<16x32xf32, #tpu.memory_space<vmem>>, %arg2: memref<1x32xf32, #tpu.memory_space<vmem>>, %arg3: memref<1x32xf32, #tpu.memory_space<vmem>>, %arg4: memref<16x32xbf16, #tpu.memory_space<vmem>>) attributes {dimension_semantics = [#tpu.dimension_semantics<parallel>], iteration_bounds = array<i64: 1>, scalar_prefetch = 0 : i64, scratch_operands = 0 : i64, tpu.core_type = #tpu.core_type<tc>, window_params = [{transform_indices = @transform_0, window_bounds = array<i64: 16, 32>}, {pipeline_mode = #tpu.pipeline_mode<synchronous>, transform_indices = @transform_1, window_bounds = array<i64: 1, 32>}, {pipeline_mode = #tpu.pipeline_mode<synchronous>, transform_indices = @transform_2, window_bounds = array<i64: 1, 32>}, {transform_indices = @transform_3, window_bounds = array<i64: 16, 32>}]} {
    %c0 = arith.constant 0 : index
    %c0_0 = arith.constant 0 : index
    %0 = vector.load %arg1[%c0, %c0_0] : memref<16x32xf32, #tpu.memory_space<vmem>>, vector<16x32xf32>
    %cst = arith.constant dense<0.000000e+00> : vector<16xf32>
    %1 = vector.multi_reduction <add>, %0, %cst [1] : vector<16x32xf32> to vector<16xf32>
    %2 = vector.shape_cast %1 : vector<16xf32> to vector<16x1xf32>
    %cst_1 = arith.constant 3.200000e+01 : f32
    %3 = vector.broadcast %cst_1 : f32 to vector<16x1xf32>
    %4 = arith.divf %2, %3 : vector<16x1xf32>
    %5 = vector.broadcast %4 : vector<16x1xf32> to vector<16x32xf32>
    %6 = arith.subf %0, %5 : vector<16x32xf32>
    %7 = arith.mulf %6, %6 : vector<16x32xf32>
    %cst_2 = arith.constant dense<0.000000e+00> : vector<16xf32>
    %8 = vector.multi_reduction <add>, %7, %cst_2 [1] : vector<16x32xf32> to vector<16xf32>
    %9 = vector.shape_cast %8 : vector<16xf32> to vector<16x1xf32>
    %cst_3 = arith.constant 3.200000e+01 : f32
    %10 = vector.broadcast %cst_3 : f32 to vector<16x1xf32>
    %11 = arith.divf %9, %10 : vector<16x1xf32>
    %12 = vector.broadcast %4 : vector<16x1xf32> to vector<16x32xf32>
    %13 = arith.subf %0, %12 : vector<16x32xf32>
    %cst_4 = arith.constant 9.99999996E-13 : f32
    %14 = vector.broadcast %cst_4 : f32 to vector<16x1xf32>
    %15 = arith.addf %11, %14 : vector<16x1xf32>
    %16 = math.rsqrt %15 : vector<16x1xf32>
    %17 = vector.broadcast %16 : vector<16x1xf32> to vector<16x32xf32>
    %18 = arith.mulf %13, %17 : vector<16x32xf32>
    %c0_5 = arith.constant 0 : index
    %c0_6 = arith.constant 0 : index
    %19 = vector.load %arg2[%c0_5, %c0_6] : memref<1x32xf32, #tpu.memory_space<vmem>>, vector<1x32xf32>
    %20 = vector.broadcast %19 : vector<1x32xf32> to vector<16x32xf32>
    %21 = arith.mulf %18, %20 : vector<16x32xf32>
    %c0_7 = arith.constant 0 : index
    %c0_8 = arith.constant 0 : index
    %22 = vector.load %arg3[%c0_7, %c0_8] : memref<1x32xf32, #tpu.memory_space<vmem>>, vector<1x32xf32>
    %23 = vector.broadcast %22 : vector<1x32xf32> to vector<16x32xf32>
    %24 = arith.addf %21, %23 : vector<16x32xf32>
    %25 = arith.truncf %24 : vector<16x32xf32> to vector<16x32xbf16>
    %c0_9 = arith.constant 0 : index
    %c0_10 = arith.constant 0 : index
    %26 = vector.load %arg4[%c0_9, %c0_10] : memref<16x32xbf16, #tpu.memory_space<vmem>>, vector<16x32xbf16>
    tpu.vector_store %arg4[%c0_9, %c0_10], %25 {strides = array<i32>} : memref<16x32xbf16, #tpu.memory_space<vmem>>, vector<16x32xbf16>,
    return
  }
  func.func @transform_0(%arg0: i32) -> (i32, i32) {
    %c0_i32 = arith.constant 0 : i32
    %c0_i32_0 = arith.constant 0 : i32
    return %arg0, %c0_i32 : i32, i32
  }
  func.func @transform_1(%arg0: i32) -> (i32, i32) {
    %c0_i32 = arith.constant 0 : i32
    %c0_i32_0 = arith.constant 0 : i32
    %c0_i32_1 = arith.constant 0 : i32
    return %c0_i32, %c0_i32_0 : i32, i32
  }
  func.func @transform_2(%arg0: i32) -> (i32, i32) {
    %c0_i32 = arith.constant 0 : i32
    %c0_i32_0 = arith.constant 0 : i32
    %c0_i32_1 = arith.constant 0 : i32
    return %c0_i32, %c0_i32_0 : i32, i32
  }
  func.func @transform_3(%arg0: i32) -> (i32, i32) {
    %c0_i32 = arith.constant 0 : i32
    %c0_i32_0 = arith.constant 0 : i32
    return %arg0, %c0_i32 : i32, i32
  }
}

module attributes {stable_mosaic.version = 11 : i64} {
  func.func @_dense_kernel(%arg0: i32, %arg1: i32, %arg2: i32, %arg3: memref<16x32xbf16, #tpu.memory_space<vmem>>, %arg4: memref<32x32xbf16, #tpu.memory_space<vmem>>, %arg5: memref<1x32xf32, #tpu.memory_space<vmem>>, %arg6: memref<16x32xbf16, #tpu.memory_space<vmem>>, %arg7: memref<16x32xbf16, #tpu.memory_space<vmem>>, %arg8: memref<16x32xf32, #tpu.memory_space<vmem>>) attributes {dimension_semantics = [#tpu.dimension_semantics<parallel>, #tpu.dimension_semantics<parallel>, #tpu.dimension_semantics<arbitrary>], iteration_bounds = array<i64: 1, 1, 1>, scalar_prefetch = 0 : i64, scratch_operands = 1 : i64, tpu.core_type = #tpu.core_type<tc>, window_params = [{transform_indices = @transform_0, window_bounds = array<i64: 16, 32>}, {transform_indices = @transform_1, window_bounds = array<i64: 32, 32>}, {transform_indices = @transform_2, window_bounds = array<i64: 1, 32>}, {transform_indices = @transform_3, window_bounds = array<i64: 16, 32>}, {transform_indices = @transform_4, window_bounds = array<i64: 16, 32>}]} {
    %c0_i32 = arith.constant 0 : i32
    %0 = arith.cmpi eq, %arg2, %c0_i32 : i32
    %1 = arith.extui %0 : i1 to i32
    %c0_i32_0 = arith.constant 0 : i32
    %2 = arith.cmpi ne, %1, %c0_i32_0 : i32
    scf.if %2 {
      %cst_10 = arith.constant 0.000000e+00 : f32
      %12 = vector.broadcast %cst_10 : f32 to vector<16x32xf32>
      %c0_11 = arith.constant 0 : index
      %c0_12 = arith.constant 0 : index
      %13 = vector.load %arg8[%c0_11, %c0_12] : memref<16x32xf32, #tpu.memory_space<vmem>>, vector<16x32xf32>
      tpu.vector_store %arg8[%c0_11, %c0_12], %12 {strides = array<i32>} : memref<16x32xf32, #tpu.memory_space<vmem>>, vector<16x32xf32>,
    } else {
    }
    %c0 = arith.constant 0 : index
    %c0_1 = arith.constant 0 : index
    %3 = vector.load %arg8[%c0, %c0_1] : memref<16x32xf32, #tpu.memory_space<vmem>>, vector<16x32xf32>
    %c0_2 = arith.constant 0 : index
    %c0_3 = arith.constant 0 : index
    %4 = vector.load %arg3[%c0_2, %c0_3] : memref<16x32xbf16, #tpu.memory_space<vmem>>, vector<16x32xbf16>
    %c0_4 = arith.constant 0 : index
    %c0_5 = arith.constant 0 : index
    %5 = vector.load %arg4[%c0_4, %c0_5] : memref<32x32xbf16, #tpu.memory_space<vmem>>, vector<32x32xbf16>
    %cst = arith.constant dense<0.000000e+00> : vector<16x32xf32>
    %6 = tpu.matmul %4, %5, %cst {dimension_numbers = #tpu.dot_dimension_numbers<[1], [0], [0], [1], [0, 0, 1, 1], [], []>} : vector<16x32xbf16>, vector<32x32xbf16>, vector<16x32xf32> -> vector<16x32xf32>
    %7 = arith.addf %3, %6 : vector<16x32xf32>
    %c0_6 = arith.constant 0 : index
    %c0_7 = arith.constant 0 : index
    %8 = vector.load %arg8[%c0_6, %c0_7] : memref<16x32xf32, #tpu.memory_space<vmem>>, vector<16x32xf32>
    tpu.vector_store %arg8[%c0_6, %c0_7], %7 {strides = array<i32>} : memref<16x32xf32, #tpu.memory_space<vmem>>, vector<16x32xf32>,
    %c0_i32_8 = arith.constant 0 : i32
    %9 = arith.cmpi eq, %arg2, %c0_i32_8 : i32
    %10 = arith.extui %9 : i1 to i32
    %c0_i32_9 = arith.constant 0 : i32
    %11 = arith.cmpi ne, %10, %c0_i32_9 : i32
    scf.if %11 {
      %c0_10 = arith.constant 0 : index
      %c0_11 = arith.constant 0 : index
      %12 = vector.load %arg8[%c0_10, %c0_11] : memref<16x32xf32, #tpu.memory_space<vmem>>, vector<16x32xf32>
      %c0_12 = arith.constant 0 : index
      %c0_13 = arith.constant 0 : index
      %13 = vector.load %arg5[%c0_12, %c0_13] : memref<1x32xf32, #tpu.memory_space<vmem>>, vector<1x32xf32>
      %14 = vector.broadcast %13 : vector<1x32xf32> to vector<16x32xf32>
      %15 = arith.addf %12, %14 : vector<16x32xf32>
      %c0_14 = arith.constant 0 : index
      %c0_15 = arith.constant 0 : index
      %16 = vector.load %arg6[%c0_14, %c0_15] : memref<16x32xbf16, #tpu.memory_space<vmem>>, vector<16x32xbf16>
      %17 = arith.extf %16 : vector<16x32xbf16> to vector<16x32xf32>
      %18 = arith.addf %15, %17 : vector<16x32xf32>
      %19 = arith.truncf %18 : vector<16x32xf32> to vector<16x32xbf16>
      %c0_16 = arith.constant 0 : index
      %c0_17 = arith.constant 0 : index
      %20 = vector.load %arg7[%c0_16, %c0_17] : memref<16x32xbf16, #tpu.memory_space<vmem>>, vector<16x32xbf16>
      tpu.vector_store %arg7[%c0_16, %c0_17], %19 {strides = array<i32>} : memref<16x32xbf16, #tpu.memory_space<vmem>>, vector<16x32xbf16>,
    } else {
    }
    return
  }
  func.func @transform_0(%arg0: i32, %arg1: i32, %arg2: i32) -> (i32, i32) {
    %c0_i32 = arith.constant 0 : i32
    return %arg0, %arg2 : i32, i32
  }
  func.func @transform_1(%arg0: i32, %arg1: i32, %arg2: i32) -> (i32, i32) {
    %c0_i32 = arith.constant 0 : i32
    return %arg2, %arg1 : i32, i32
  }
  func.func @transform_2(%arg0: i32, %arg1: i32, %arg2: i32) -> (i32, i32) {
    %c0_i32 = arith.constant 0 : i32
    %c0_i32_0 = arith.constant 0 : i32
    return %c0_i32, %arg1 : i32, i32
  }
  func.func @transform_3(%arg0: i32, %arg1: i32, %arg2: i32) -> (i32, i32) {
    %c0_i32 = arith.constant 0 : i32
    return %arg0, %arg1 : i32, i32
  }
  func.func @transform_4(%arg0: i32, %arg1: i32, %arg2: i32) -> (i32, i32) {
    %c0_i32 = arith.constant 0 : i32
    return %arg0, %arg1 : i32, i32
  }
}

module attributes {stable_mosaic.version = 11 : i64} {
  func.func @_attn_kernel_packed(%arg0: i32, %arg1: memref<1x8x96xbf16, #tpu.memory_space<vmem>>, %arg2: memref<1x8x32xbf16, #tpu.memory_space<vmem>>, %arg3: memref<8x32xf32, #tpu.memory_space<vmem>>) attributes {dimension_semantics = [#tpu.dimension_semantics<parallel>], iteration_bounds = array<i64: 2>, scalar_prefetch = 0 : i64, scratch_operands = 1 : i64, tpu.core_type = #tpu.core_type<tc>, window_params = [{transform_indices = @transform_0, window_bounds = array<i64: 1, 8, 96>}, {transform_indices = @transform_1, window_bounds = array<i64: 1, 8, 32>}]} {
    %c0 = arith.constant 0 : index
    %c0_0 = arith.constant 0 : index
    %c0_1 = arith.constant 0 : index
    %0 = vector.load %arg1[%c0, %c0_0, %c0_1] : memref<1x8x96xbf16, #tpu.memory_space<vmem>>, vector<1x8x96xbf16>
    %1 = vector.shape_cast %0 : vector<1x8x96xbf16> to vector<8x96xbf16>
    %2 = vector.extract_strided_slice %1 {offsets = [0, 0], sizes = [8, 32], strides = [1, 1]} : vector<8x96xbf16> to vector<8x32xbf16>
    %3 = vector.extract_strided_slice %1 {offsets = [0, 32], sizes = [8, 32], strides = [1, 1]} : vector<8x96xbf16> to vector<8x32xbf16>
    %4 = vector.extract_strided_slice %1 {offsets = [0, 64], sizes = [8, 32], strides = [1, 1]} : vector<8x96xbf16> to vector<8x32xbf16>
    %5 = vector.extract_strided_slice %2 {offsets = [0, 0], sizes = [8, 8], strides = [1, 1]} : vector<8x32xbf16> to vector<8x8xbf16>
    %6 = vector.extract_strided_slice %3 {offsets = [0, 0], sizes = [8, 8], strides = [1, 1]} : vector<8x32xbf16> to vector<8x8xbf16>
    %cst = arith.constant dense<0.000000e+00> : vector<8x8xf32>
    %7 = tpu.matmul %5, %6, %cst {dimension_numbers = #tpu.dot_dimension_numbers<[1], [1], [0], [0], [0, 0, 1, 0], [], []>} : vector<8x8xbf16>, vector<8x8xbf16>, vector<8x8xf32> -> vector<8x8xf32>
    %cst_2 = arith.constant dense<0xFF800000> : vector<8xf32>
    %8 = vector.multi_reduction <maximumf>, %7, %cst_2 [1] : vector<8x8xf32> to vector<8xf32>
    %9 = vector.shape_cast %8 : vector<8xf32> to vector<8x1xf32>
    %10 = vector.broadcast %9 : vector<8x1xf32> to vector<8x8xf32>
    %11 = arith.subf %7, %10 : vector<8x8xf32>
    %12 = math.exp %11 : vector<8x8xf32>
    %cst_3 = arith.constant dense<0.000000e+00> : vector<8xf32>
    %13 = vector.multi_reduction <add>, %12, %cst_3 [1] : vector<8x8xf32> to vector<8xf32>
    %14 = vector.shape_cast %13 : vector<8xf32> to vector<8x1xf32>
    %15 = tpu.reciprocal %14 {approx = true} : vector<8x1xf32> -> vector<8x1xf32>
    %16 = vector.broadcast %15 : vector<8x1xf32> to vector<8x8xf32>
    %17 = arith.mulf %12, %16 : vector<8x8xf32>
    %18 = arith.truncf %17 : vector<8x8xf32> to vector<8x8xbf16>
    %19 = vector.extract_strided_slice %4 {offsets = [0, 0], sizes = [8, 8], strides = [1, 1]} : vector<8x32xbf16> to vector<8x8xbf16>
    %cst_4 = arith.constant dense<0.000000e+00> : vector<8x8xf32>
    %20 = tpu.matmul %18, %19, %cst_4 {dimension_numbers = #tpu.dot_dimension_numbers<[1], [0], [0], [1], [0, 0, 1, 1], [], []>} : vector<8x8xbf16>, vector<8x8xbf16>, vector<8x8xf32> -> vector<8x8xf32>
    %c0_5 = arith.constant 0 : index
    %c0_6 = arith.constant 0 : index
    %21 = vector.load %arg3[%c0_5, %c0_6] : memref<8x32xf32, #tpu.memory_space<vmem>>, vector<8x8xf32>
    tpu.vector_store %arg3[%c0_5, %c0_6], %20 {strides = array<i32>} : memref<8x32xf32, #tpu.memory_space<vmem>>, vector<8x8xf32>,
    %22 = vector.extract_strided_slice %2 {offsets = [0, 8], sizes = [8, 8], strides = [1, 1]} : vector<8x32xbf16> to vector<8x8xbf16>
    %23 = vector.extract_strided_slice %3 {offsets = [0, 8], sizes = [8, 8], strides = [1, 1]} : vector<8x32xbf16> to vector<8x8xbf16>
    %cst_7 = arith.constant dense<0.000000e+00> : vector<8x8xf32>
    %24 = tpu.matmul %22, %23, %cst_7 {dimension_numbers = #tpu.dot_dimension_numbers<[1], [1], [0], [0], [0, 0, 1, 0], [], []>} : vector<8x8xbf16>, vector<8x8xbf16>, vector<8x8xf32> -> vector<8x8xf32>
    %cst_8 = arith.constant dense<0xFF800000> : vector<8xf32>
    %25 = vector.multi_reduction <maximumf>, %24, %cst_8 [1] : vector<8x8xf32> to vector<8xf32>
    %26 = vector.shape_cast %25 : vector<8xf32> to vector<8x1xf32>
    %27 = vector.broadcast %26 : vector<8x1xf32> to vector<8x8xf32>
    %28 = arith.subf %24, %27 : vector<8x8xf32>
    %29 = math.exp %28 : vector<8x8xf32>
    %cst_9 = arith.constant dense<0.000000e+00> : vector<8xf32>
    %30 = vector.multi_reduction <add>, %29, %cst_9 [1] : vector<8x8xf32> to vector<8xf32>
    %31 = vector.shape_cast %30 : vector<8xf32> to vector<8x1xf32>
    %32 = tpu.reciprocal %31 {approx = true} : vector<8x1xf32> -> vector<8x1xf32>
    %33 = vector.broadcast %32 : vector<8x1xf32> to vector<8x8xf32>
    %34 = arith.mulf %29, %33 : vector<8x8xf32>
    %35 = arith.truncf %34 : vector<8x8xf32> to vector<8x8xbf16>
    %36 = vector.extract_strided_slice %4 {offsets = [0, 8], sizes = [8, 8], strides = [1, 1]} : vector<8x32xbf16> to vector<8x8xbf16>
    %cst_10 = arith.constant dense<0.000000e+00> : vector<8x8xf32>
    %37 = tpu.matmul %35, %36, %cst_10 {dimension_numbers = #tpu.dot_dimension_numbers<[1], [0], [0], [1], [0, 0, 1, 1], [], []>} : vector<8x8xbf16>, vector<8x8xbf16>, vector<8x8xf32> -> vector<8x8xf32>
    %c0_11 = arith.constant 0 : index
    %c8 = arith.constant 8 : index
    %38 = vector.load %arg3[%c0_11, %c8] : memref<8x32xf32, #tpu.memory_space<vmem>>, vector<8x8xf32>
    tpu.vector_store %arg3[%c0_11, %c8], %37 {strides = array<i32>} : memref<8x32xf32, #tpu.memory_space<vmem>>, vector<8x8xf32>,
    %39 = vector.extract_strided_slice %2 {offsets = [0, 16], sizes = [8, 8], strides = [1, 1]} : vector<8x32xbf16> to vector<8x8xbf16>
    %40 = vector.extract_strided_slice %3 {offsets = [0, 16], sizes = [8, 8], strides = [1, 1]} : vector<8x32xbf16> to vector<8x8xbf16>
    %cst_12 = arith.constant dense<0.000000e+00> : vector<8x8xf32>
    %41 = tpu.matmul %39, %40, %cst_12 {dimension_numbers = #tpu.dot_dimension_numbers<[1], [1], [0], [0], [0, 0, 1, 0], [], []>} : vector<8x8xbf16>, vector<8x8xbf16>, vector<8x8xf32> -> vector<8x8xf32>
    %cst_13 = arith.constant dense<0xFF800000> : vector<8xf32>
    %42 = vector.multi_reduction <maximumf>, %41, %cst_13 [1] : vector<8x8xf32> to vector<8xf32>
    %43 = vector.shape_cast %42 : vector<8xf32> to vector<8x1xf32>
    %44 = vector.broadcast %43 : vector<8x1xf32> to vector<8x8xf32>
    %45 = arith.subf %41, %44 : vector<8x8xf32>
    %46 = math.exp %45 : vector<8x8xf32>
    %cst_14 = arith.constant dense<0.000000e+00> : vector<8xf32>
    %47 = vector.multi_reduction <add>, %46, %cst_14 [1] : vector<8x8xf32> to vector<8xf32>
    %48 = vector.shape_cast %47 : vector<8xf32> to vector<8x1xf32>
    %49 = tpu.reciprocal %48 {approx = true} : vector<8x1xf32> -> vector<8x1xf32>
    %50 = vector.broadcast %49 : vector<8x1xf32> to vector<8x8xf32>
    %51 = arith.mulf %46, %50 : vector<8x8xf32>
    %52 = arith.truncf %51 : vector<8x8xf32> to vector<8x8xbf16>
    %53 = vector.extract_strided_slice %4 {offsets = [0, 16], sizes = [8, 8], strides = [1, 1]} : vector<8x32xbf16> to vector<8x8xbf16>
    %cst_15 = arith.constant dense<0.000000e+00> : vector<8x8xf32>
    %54 = tpu.matmul %52, %53, %cst_15 {dimension_numbers = #tpu.dot_dimension_numbers<[1], [0], [0], [1], [0, 0, 1, 1], [], []>} : vector<8x8xbf16>, vector<8x8xbf16>, vector<8x8xf32> -> vector<8x8xf32>
    %c0_16 = arith.constant 0 : index
    %c16 = arith.constant 16 : index
    %55 = vector.load %arg3[%c0_16, %c16] : memref<8x32xf32, #tpu.memory_space<vmem>>, vector<8x8xf32>
    tpu.vector_store %arg3[%c0_16, %c16], %54 {strides = array<i32>} : memref<8x32xf32, #tpu.memory_space<vmem>>, vector<8x8xf32>,
    %56 = vector.extract_strided_slice %2 {offsets = [0, 24], sizes = [8, 8], strides = [1, 1]} : vector<8x32xbf16> to vector<8x8xbf16>
    %57 = vector.extract_strided_slice %3 {offsets = [0, 24], sizes = [8, 8], strides = [1, 1]} : vector<8x32xbf16> to vector<8x8xbf16>
    %cst_17 = arith.constant dense<0.000000e+00> : vector<8x8xf32>
    %58 = tpu.matmul %56, %57, %cst_17 {dimension_numbers = #tpu.dot_dimension_numbers<[1], [1], [0], [0], [0, 0, 1, 0], [], []>} : vector<8x8xbf16>, vector<8x8xbf16>, vector<8x8xf32> -> vector<8x8xf32>
    %cst_18 = arith.constant dense<0xFF800000> : vector<8xf32>
    %59 = vector.multi_reduction <maximumf>, %58, %cst_18 [1] : vector<8x8xf32> to vector<8xf32>
    %60 = vector.shape_cast %59 : vector<8xf32> to vector<8x1xf32>
    %61 = vector.broadcast %60 : vector<8x1xf32> to vector<8x8xf32>
    %62 = arith.subf %58, %61 : vector<8x8xf32>
    %63 = math.exp %62 : vector<8x8xf32>
    %cst_19 = arith.constant dense<0.000000e+00> : vector<8xf32>
    %64 = vector.multi_reduction <add>, %63, %cst_19 [1] : vector<8x8xf32> to vector<8xf32>
    %65 = vector.shape_cast %64 : vector<8xf32> to vector<8x1xf32>
    %66 = tpu.reciprocal %65 {approx = true} : vector<8x1xf32> -> vector<8x1xf32>
    %67 = vector.broadcast %66 : vector<8x1xf32> to vector<8x8xf32>
    %68 = arith.mulf %63, %67 : vector<8x8xf32>
    %69 = arith.truncf %68 : vector<8x8xf32> to vector<8x8xbf16>
    %70 = vector.extract_strided_slice %4 {offsets = [0, 24], sizes = [8, 8], strides = [1, 1]} : vector<8x32xbf16> to vector<8x8xbf16>
    %cst_20 = arith.constant dense<0.000000e+00> : vector<8x8xf32>
    %71 = tpu.matmul %69, %70, %cst_20 {dimension_numbers = #tpu.dot_dimension_numbers<[1], [0], [0], [1], [0, 0, 1, 1], [], []>} : vector<8x8xbf16>, vector<8x8xbf16>, vector<8x8xf32> -> vector<8x8xf32>
    %c0_21 = arith.constant 0 : index
    %c24 = arith.constant 24 : index
    %72 = vector.load %arg3[%c0_21, %c24] : memref<8x32xf32, #tpu.memory_space<vmem>>, vector<8x8xf32>
    tpu.vector_store %arg3[%c0_21, %c24], %71 {strides = array<i32>} : memref<8x32xf32, #tpu.memory_space<vmem>>, vector<8x8xf32>,
    %c0_22 = arith.constant 0 : index
    %c0_23 = arith.constant 0 : index
    %73 = vector.load %arg3[%c0_22, %c0_23] : memref<8x32xf32, #tpu.memory_space<vmem>>, vector<8x32xf32>
    %74 = arith.truncf %73 : vector<8x32xf32> to vector<8x32xbf16>
    %c0_24 = arith.constant 0 : index
    %c0_25 = arith.constant 0 : index
    %c0_26 = arith.constant 0 : index
    %75 = vector.load %arg2[%c0_24, %c0_25, %c0_26] : memref<1x8x32xbf16, #tpu.memory_space<vmem>>, vector<1x8x32xbf16>
    %76 = vector.shape_cast %75 : vector<1x8x32xbf16> to vector<8x32xbf16>
    %77 = vector.shape_cast %74 : vector<8x32xbf16> to vector<1x8x32xbf16>
    tpu.vector_store %arg2[%c0_24, %c0_25, %c0_26], %77 {strides = array<i32>} : memref<1x8x32xbf16, #tpu.memory_space<vmem>>, vector<1x8x32xbf16>,
    return
  }
  func.func @transform_0(%arg0: i32) -> (i32, i32, i32) {
    %c0_i32 = arith.constant 0 : i32
    %c0_i32_0 = arith.constant 0 : i32
    %c0_i32_1 = arith.constant 0 : i32
    return %arg0, %c0_i32, %c0_i32_0 : i32, i32, i32
  }
  func.func @transform_1(%arg0: i32) -> (i32, i32, i32) {
    %c0_i32 = arith.constant 0 : i32
    %c0_i32_0 = arith.constant 0 : i32
    %c0_i32_1 = arith.constant 0 : i32
    return %arg0, %c0_i32, %c0_i32_0 : i32, i32, i32
  }
}

module attributes {stable_mosaic.version = 11 : i64} {
  func.func @_dense_kernel(%arg0: i32, %arg1: i32, %arg2: i32, %arg3: memref<16x32xbf16, #tpu.memory_space<vmem>>, %arg4: memref<32x96xbf16, #tpu.memory_space<vmem>>, %arg5: memref<1x96xf32, #tpu.memory_space<vmem>>, %arg6: memref<16x96xbf16, #tpu.memory_space<vmem>>, %arg7: memref<16x96xf32, #tpu.memory_space<vmem>>) attributes {dimension_semantics = [#tpu.dimension_semantics<parallel>, #tpu.dimension_semantics<parallel>, #tpu.dimension_semantics<arbitrary>], iteration_bounds = array<i64: 1, 1, 1>, scalar_prefetch = 0 : i64, scratch_operands = 1 : i64, tpu.core_type = #tpu.core_type<tc>, window_params = [{transform_indices = @transform_0, window_bounds = array<i64: 16, 32>}, {transform_indices = @transform_1, window_bounds = array<i64: 32, 96>}, {transform_indices = @transform_2, window_bounds = array<i64: 1, 96>}, {transform_indices = @transform_3, window_bounds = array<i64: 16, 96>}]} {
    %c0_i32 = arith.constant 0 : i32
    %0 = arith.cmpi eq, %arg2, %c0_i32 : i32
    %1 = arith.extui %0 : i1 to i32
    %c0_i32_0 = arith.constant 0 : i32
    %2 = arith.cmpi ne, %1, %c0_i32_0 : i32
    scf.if %2 {
      %cst_10 = arith.constant 0.000000e+00 : f32
      %12 = vector.broadcast %cst_10 : f32 to vector<16x96xf32>
      %c0_11 = arith.constant 0 : index
      %c0_12 = arith.constant 0 : index
      %13 = vector.load %arg7[%c0_11, %c0_12] : memref<16x96xf32, #tpu.memory_space<vmem>>, vector<16x96xf32>
      tpu.vector_store %arg7[%c0_11, %c0_12], %12 {strides = array<i32>} : memref<16x96xf32, #tpu.memory_space<vmem>>, vector<16x96xf32>,
    } else {
    }
    %c0 = arith.constant 0 : index
    %c0_1 = arith.constant 0 : index
    %3 = vector.load %arg7[%c0, %c0_1] : memref<16x96xf32, #tpu.memory_space<vmem>>, vector<16x96xf32>
    %c0_2 = arith.constant 0 : index
    %c0_3 = arith.constant 0 : index
    %4 = vector.load %arg3[%c0_2, %c0_3] : memref<16x32xbf16, #tpu.memory_space<vmem>>, vector<16x32xbf16>
    %c0_4 = arith.constant 0 : index
    %c0_5 = arith.constant 0 : index
    %5 = vector.load %arg4[%c0_4, %c0_5] : memref<32x96xbf16, #tpu.memory_space<vmem>>, vector<32x96xbf16>
    %cst = arith.constant dense<0.000000e+00> : vector<16x96xf32>
    %6 = tpu.matmul %4, %5, %cst {dimension_numbers = #tpu.dot_dimension_numbers<[1], [0], [0], [1], [0, 0, 1, 1], [], []>} : vector<16x32xbf16>, vector<32x96xbf16>, vector<16x96xf32> -> vector<16x96xf32>
    %7 = arith.addf %3, %6 : vector<16x96xf32>
    %c0_6 = arith.constant 0 : index
    %c0_7 = arith.constant 0 : index
    %8 = vector.load %arg7[%c0_6, %c0_7] : memref<16x96xf32, #tpu.memory_space<vmem>>, vector<16x96xf32>
    tpu.vector_store %arg7[%c0_6, %c0_7], %7 {strides = array<i32>} : memref<16x96xf32, #tpu.memory_space<vmem>>, vector<16x96xf32>,
    %c0_i32_8 = arith.constant 0 : i32
    %9 = arith.cmpi eq, %arg2, %c0_i32_8 : i32
    %10 = arith.extui %9 : i1 to i32
    %c0_i32_9 = arith.constant 0 : i32
    %11 = arith.cmpi ne, %10, %c0_i32_9 : i32
    scf.if %11 {
      %c0_10 = arith.constant 0 : index
      %c0_11 = arith.constant 0 : index
      %12 = vector.load %arg7[%c0_10, %c0_11] : memref<16x96xf32, #tpu.memory_space<vmem>>, vector<16x96xf32>
      %c0_12 = arith.constant 0 : index
      %c0_13 = arith.constant 0 : index
      %13 = vector.load %arg5[%c0_12, %c0_13] : memref<1x96xf32, #tpu.memory_space<vmem>>, vector<1x96xf32>
      %14 = vector.broadcast %13 : vector<1x96xf32> to vector<16x96xf32>
      %15 = arith.addf %12, %14 : vector<16x96xf32>
      %16 = arith.truncf %15 : vector<16x96xf32> to vector<16x96xbf16>
      %c0_14 = arith.constant 0 : index
      %c0_15 = arith.constant 0 : index
      %17 = vector.load %arg6[%c0_14, %c0_15] : memref<16x96xbf16, #tpu.memory_space<vmem>>, vector<16x96xbf16>
      tpu.vector_store %arg6[%c0_14, %c0_15], %16 {strides = array<i32>} : memref<16x96xbf16, #tpu.memory_space<vmem>>, vector<16x96xbf16>,
    } else {
    }
    return
  }
  func.func @transform_0(%arg0: i32, %arg1: i32, %arg2: i32) -> (i32, i32) {
    %c0_i32 = arith.constant 0 : i32
    return %arg0, %arg2 : i32, i32
  }
  func.func @transform_1(%arg0: i32, %arg1: i32, %arg2: i32) -> (i32, i32) {
    %c0_i32 = arith.constant 0 : i32
    return %arg2, %arg1 : i32, i32
  }
  func.func @transform_2(%arg0: i32, %arg1: i32, %arg2: i32) -> (i32, i32) {
    %c0_i32 = arith.constant 0 : i32
    %c0_i32_0 = arith.constant 0 : i32
    return %c0_i32, %arg1 : i32, i32
  }
  func.func @transform_3(%arg0: i32, %arg1: i32, %arg2: i32) -> (i32, i32) {
    %c0_i32 = arith.constant 0 : i32
    return %arg0, %arg1 : i32, i32
  }
}

module attributes {stable_mosaic.version = 11 : i64} {
  func.func @_ln_kernel(%arg0: i32, %arg1: memref<16x32xbf16, #tpu.memory_space<vmem>>, %arg2: memref<1x32xf32, #tpu.memory_space<vmem>>, %arg3: memref<1x32xf32, #tpu.memory_space<vmem>>, %arg4: memref<16x32xbf16, #tpu.memory_space<vmem>>) attributes {dimension_semantics = [#tpu.dimension_semantics<parallel>], iteration_bounds = array<i64: 1>, scalar_prefetch = 0 : i64, scratch_operands = 0 : i64, tpu.core_type = #tpu.core_type<tc>, window_params = [{transform_indices = @transform_0, window_bounds = array<i64: 16, 32>}, {pipeline_mode = #tpu.pipeline_mode<synchronous>, transform_indices = @transform_1, window_bounds = array<i64: 1, 32>}, {pipeline_mode = #tpu.pipeline_mode<synchronous>, transform_indices = @transform_2, window_bounds = array<i64: 1, 32>}, {transform_indices = @transform_3, window_bounds = array<i64: 16, 32>}]} {
    %c0 = arith.constant 0 : index
    %c0_0 = arith.constant 0 : index
    %0 = vector.load %arg1[%c0, %c0_0] : memref<16x32xbf16, #tpu.memory_space<vmem>>, vector<16x32xbf16>
    %1 = arith.extf %0 : vector<16x32xbf16> to vector<16x32xf32>
    %cst = arith.constant dense<0.000000e+00> : vector<16xf32>
    %2 = vector.multi_reduction <add>, %1, %cst [1] : vector<16x32xf32> to vector<16xf32>
    %3 = vector.shape_cast %2 : vector<16xf32> to vector<16x1xf32>
    %cst_1 = arith.constant 3.200000e+01 : f32
    %4 = vector.broadcast %cst_1 : f32 to vector<16x1xf32>
    %5 = arith.divf %3, %4 : vector<16x1xf32>
    %6 = vector.broadcast %5 : vector<16x1xf32> to vector<16x32xf32>
    %7 = arith.subf %1, %6 : vector<16x32xf32>
    %8 = arith.mulf %7, %7 : vector<16x32xf32>
    %cst_2 = arith.constant dense<0.000000e+00> : vector<16xf32>
    %9 = vector.multi_reduction <add>, %8, %cst_2 [1] : vector<16x32xf32> to vector<16xf32>
    %10 = vector.shape_cast %9 : vector<16xf32> to vector<16x1xf32>
    %cst_3 = arith.constant 3.200000e+01 : f32
    %11 = vector.broadcast %cst_3 : f32 to vector<16x1xf32>
    %12 = arith.divf %10, %11 : vector<16x1xf32>
    %13 = vector.broadcast %5 : vector<16x1xf32> to vector<16x32xf32>
    %14 = arith.subf %1, %13 : vector<16x32xf32>
    %cst_4 = arith.constant 9.99999996E-13 : f32
    %15 = vector.broadcast %cst_4 : f32 to vector<16x1xf32>
    %16 = arith.addf %12, %15 : vector<16x1xf32>
    %17 = math.rsqrt %16 : vector<16x1xf32>
    %18 = vector.broadcast %17 : vector<16x1xf32> to vector<16x32xf32>
    %19 = arith.mulf %14, %18 : vector<16x32xf32>
    %c0_5 = arith.constant 0 : index
    %c0_6 = arith.constant 0 : index
    %20 = vector.load %arg2[%c0_5, %c0_6] : memref<1x32xf32, #tpu.memory_space<vmem>>, vector<1x32xf32>
    %21 = vector.broadcast %20 : vector<1x32xf32> to vector<16x32xf32>
    %22 = arith.mulf %19, %21 : vector<16x32xf32>
    %c0_7 = arith.constant 0 : index
    %c0_8 = arith.constant 0 : index
    %23 = vector.load %arg3[%c0_7, %c0_8] : memref<1x32xf32, #tpu.memory_space<vmem>>, vector<1x32xf32>
    %24 = vector.broadcast %23 : vector<1x32xf32> to vector<16x32xf32>
    %25 = arith.addf %22, %24 : vector<16x32xf32>
    %26 = arith.truncf %25 : vector<16x32xf32> to vector<16x32xbf16>
    %c0_9 = arith.constant 0 : index
    %c0_10 = arith.constant 0 : index
    %27 = vector.load %arg4[%c0_9, %c0_10] : memref<16x32xbf16, #tpu.memory_space<vmem>>, vector<16x32xbf16>
    tpu.vector_store %arg4[%c0_9, %c0_10], %26 {strides = array<i32>} : memref<16x32xbf16, #tpu.memory_space<vmem>>, vector<16x32xbf16>,
    return
  }
  func.func @transform_0(%arg0: i32) -> (i32, i32) {
    %c0_i32 = arith.constant 0 : i32
    %c0_i32_0 = arith.constant 0 : i32
    return %arg0, %c0_i32 : i32, i32
  }
  func.func @transform_1(%arg0: i32) -> (i32, i32) {
    %c0_i32 = arith.constant 0 : i32
    %c0_i32_0 = arith.constant 0 : i32
    %c0_i32_1 = arith.constant 0 : i32
    return %c0_i32, %c0_i32_0 : i32, i32
  }
  func.func @transform_2(%arg0: i32) -> (i32, i32) {
    %c0_i32 = arith.constant 0 : i32
    %c0_i32_0 = arith.constant 0 : i32
    %c0_i32_1 = arith.constant 0 : i32
    return %c0_i32, %c0_i32_0 : i32, i32
  }
  func.func @transform_3(%arg0: i32) -> (i32, i32) {
    %c0_i32 = arith.constant 0 : i32
    %c0_i32_0 = arith.constant 0 : i32
    return %arg0, %c0_i32 : i32, i32
  }
}

module attributes {stable_mosaic.version = 11 : i64} {
  func.func @_ffn_kernel(%arg0: i32, %arg1: i32, %arg2: memref<16x32xbf16, #tpu.memory_space<vmem>>, %arg3: memref<32x64xbf16, #tpu.memory_space<vmem>>, %arg4: memref<1x64xf32, #tpu.memory_space<vmem>>, %arg5: memref<64x32xbf16, #tpu.memory_space<vmem>>, %arg6: memref<1x32xf32, #tpu.memory_space<vmem>>, %arg7: memref<16x32xbf16, #tpu.memory_space<vmem>>, %arg8: memref<16x32xbf16, #tpu.memory_space<vmem>>, %arg9: memref<16x32xf32, #tpu.memory_space<vmem>>) attributes {dimension_semantics = [#tpu.dimension_semantics<parallel>, #tpu.dimension_semantics<arbitrary>], iteration_bounds = array<i64: 1, 1>, scalar_prefetch = 0 : i64, scratch_operands = 1 : i64, tpu.core_type = #tpu.core_type<tc>, window_params = [{transform_indices = @transform_0, window_bounds = array<i64: 16, 32>}, {transform_indices = @transform_1, window_bounds = array<i64: 32, 64>}, {transform_indices = @transform_2, window_bounds = array<i64: 1, 64>}, {transform_indices = @transform_3, window_bounds = array<i64: 64, 32>}, {pipeline_mode = #tpu.pipeline_mode<synchronous>, transform_indices = @transform_4, window_bounds = array<i64: 1, 32>}, {transform_indices = @transform_5, window_bounds = array<i64: 16, 32>}, {transform_indices = @transform_6, window_bounds = array<i64: 16, 32>}]} {
    %c0_i32 = arith.constant 0 : i32
    %0 = arith.cmpi eq, %arg1, %c0_i32 : i32
    %1 = arith.extui %0 : i1 to i32
    %c0_i32_0 = arith.constant 0 : i32
    %2 = arith.cmpi ne, %1, %c0_i32_0 : i32
    scf.if %2 {
      %cst_19 = arith.constant 0.000000e+00 : f32
      %31 = vector.broadcast %cst_19 : f32 to vector<16x32xf32>
      %c0_20 = arith.constant 0 : index
      %c0_21 = arith.constant 0 : index
      %32 = vector.load %arg9[%c0_20, %c0_21] : memref<16x32xf32, #tpu.memory_space<vmem>>, vector<16x32xf32>
      tpu.vector_store %arg9[%c0_20, %c0_21], %31 {strides = array<i32>} : memref<16x32xf32, #tpu.memory_space<vmem>>, vector<16x32xf32>,
    } else {
    }
    %c0 = arith.constant 0 : index
    %c0_1 = arith.constant 0 : index
    %3 = vector.load %arg2[%c0, %c0_1] : memref<16x32xbf16, #tpu.memory_space<vmem>>, vector<16x32xbf16>
    %c0_2 = arith.constant 0 : index
    %c0_3 = arith.constant 0 : index
    %4 = vector.load %arg3[%c0_2, %c0_3] : memref<32x64xbf16, #tpu.memory_space<vmem>>, vector<32x64xbf16>
    %cst = arith.constant dense<0.000000e+00> : vector<16x64xf32>
    %5 = tpu.matmul %3, %4, %cst {dimension_numbers = #tpu.dot_dimension_numbers<[1], [0], [0], [1], [0, 0, 1, 1], [], []>} : vector<16x32xbf16>, vector<32x64xbf16>, vector<16x64xf32> -> vector<16x64xf32>
    %c0_4 = arith.constant 0 : index
    %c0_5 = arith.constant 0 : index
    %6 = vector.load %arg4[%c0_4, %c0_5] : memref<1x64xf32, #tpu.memory_space<vmem>>, vector<1x64xf32>
    %7 = vector.broadcast %6 : vector<1x64xf32> to vector<16x64xf32>
    %8 = arith.addf %5, %7 : vector<16x64xf32>
    %cst_6 = arith.constant 5.000000e-01 : f32
    %9 = vector.broadcast %cst_6 : f32 to vector<16x64xf32>
    %10 = arith.mulf %9, %8 : vector<16x64xf32>
    %cst_7 = arith.constant 4.471500e-02 : f32
    %11 = vector.broadcast %cst_7 : f32 to vector<16x64xf32>
    %12 = arith.mulf %11, %8 : vector<16x64xf32>
    %13 = arith.mulf %12, %8 : vector<16x64xf32>
    %14 = arith.mulf %13, %8 : vector<16x64xf32>
    %15 = arith.addf %8, %14 : vector<16x64xf32>
    %cst_8 = arith.constant 0.797884583 : f32
    %16 = vector.broadcast %cst_8 : f32 to vector<16x64xf32>
    %17 = arith.mulf %16, %15 : vector<16x64xf32>
    %18 = math.tanh %17 : vector<16x64xf32>
    %cst_9 = arith.constant 1.000000e+00 : f32
    %19 = vector.broadcast %cst_9 : f32 to vector<16x64xf32>
    %20 = arith.addf %19, %18 : vector<16x64xf32>
    %21 = arith.mulf %10, %20 : vector<16x64xf32>
    %c0_10 = arith.constant 0 : index
    %c0_11 = arith.constant 0 : index
    %22 = vector.load %arg9[%c0_10, %c0_11] : memref<16x32xf32, #tpu.memory_space<vmem>>, vector<16x32xf32>
    %23 = arith.truncf %21 : vector<16x64xf32> to vector<16x64xbf16>
    %c0_12 = arith.constant 0 : index
    %c0_13 = arith.constant 0 : index
    %24 = vector.load %arg5[%c0_12, %c0_13] : memref<64x32xbf16, #tpu.memory_space<vmem>>, vector<64x32xbf16>
    %cst_14 = arith.constant dense<0.000000e+00> : vector<16x32xf32>
    %25 = tpu.matmul %23, %24, %cst_14 {dimension_numbers = #tpu.dot_dimension_numbers<[1], [0], [0], [1], [0, 0, 1, 1], [], []>} : vector<16x64xbf16>, vector<64x32xbf16>, vector<16x32xf32> -> vector<16x32xf32>
    %26 = arith.addf %22, %25 : vector<16x32xf32>
    %c0_15 = arith.constant 0 : index
    %c0_16 = arith.constant 0 : index
    %27 = vector.load %arg9[%c0_15, %c0_16] : memref<16x32xf32, #tpu.memory_space<vmem>>, vector<16x32xf32>
    tpu.vector_store %arg9[%c0_15, %c0_16], %26 {strides = array<i32>} : memref<16x32xf32, #tpu.memory_space<vmem>>, vector<16x32xf32>,
    %c0_i32_17 = arith.constant 0 : i32
    %28 = arith.cmpi eq, %arg1, %c0_i32_17 : i32
    %29 = arith.extui %28 : i1 to i32
    %c0_i32_18 = arith.constant 0 : i32
    %30 = arith.cmpi ne, %29, %c0_i32_18 : i32
    scf.if %30 {
      %c0_19 = arith.constant 0 : index
      %c0_20 = arith.constant 0 : index
      %31 = vector.load %arg9[%c0_19, %c0_20] : memref<16x32xf32, #tpu.memory_space<vmem>>, vector<16x32xf32>
      %c0_21 = arith.constant 0 : index
      %c0_22 = arith.constant 0 : index
      %32 = vector.load %arg6[%c0_21, %c0_22] : memref<1x32xf32, #tpu.memory_space<vmem>>, vector<1x32xf32>
      %33 = vector.broadcast %32 : vector<1x32xf32> to vector<16x32xf32>
      %34 = arith.addf %31, %33 : vector<16x32xf32>
      %c0_23 = arith.constant 0 : index
      %c0_24 = arith.constant 0 : index
      %35 = vector.load %arg7[%c0_23, %c0_24] : memref<16x32xbf16, #tpu.memory_space<vmem>>, vector<16x32xbf16>
      %36 = arith.extf %35 : vector<16x32xbf16> to vector<16x32xf32>
      %37 = arith.addf %34, %36 : vector<16x32xf32>
      %38 = arith.truncf %37 : vector<16x32xf32> to vector<16x32xbf16>
      %c0_25 = arith.constant 0 : index
      %c0_26 = arith.constant 0 : index
      %39 = vector.load %arg8[%c0_25, %c0_26] : memref<16x32xbf16, #tpu.memory_space<vmem>>, vector<16x32xbf16>
      tpu.vector_store %arg8[%c0_25, %c0_26], %38 {strides = array<i32>} : memref<16x32xbf16, #tpu.memory_space<vmem>>, vector<16x32xbf16>,
    } else {
    }
    return
  }
  func.func @transform_0(%arg0: i32, %arg1: i32) -> (i32, i32) {
    %c0_i32 = arith.constant 0 : i32
    %c0_i32_0 = arith.constant 0 : i32
    return %arg0, %c0_i32 : i32, i32
  }
  func.func @transform_1(%arg0: i32, %arg1: i32) -> (i32, i32) {
    %c0_i32 = arith.constant 0 : i32
    %c0_i32_0 = arith.constant 0 : i32
    return %c0_i32, %arg1 : i32, i32
  }
  func.func @transform_2(%arg0: i32, %arg1: i32) -> (i32, i32) {
    %c0_i32 = arith.constant 0 : i32
    %c0_i32_0 = arith.constant 0 : i32
    return %c0_i32, %arg1 : i32, i32
  }
  func.func @transform_3(%arg0: i32, %arg1: i32) -> (i32, i32) {
    %c0_i32 = arith.constant 0 : i32
    %c0_i32_0 = arith.constant 0 : i32
    return %arg1, %c0_i32 : i32, i32
  }
  func.func @transform_4(%arg0: i32, %arg1: i32) -> (i32, i32) {
    %c0_i32 = arith.constant 0 : i32
    %c0_i32_0 = arith.constant 0 : i32
    %c0_i32_1 = arith.constant 0 : i32
    return %c0_i32, %c0_i32_0 : i32, i32
  }
  func.func @transform_5(%arg0: i32, %arg1: i32) -> (i32, i32) {
    %c0_i32 = arith.constant 0 : i32
    %c0_i32_0 = arith.constant 0 : i32
    return %arg0, %c0_i32 : i32, i32
  }
  func.func @transform_6(%arg0: i32, %arg1: i32) -> (i32, i32) {
    %c0_i32 = arith.constant 0 : i32
    %c0_i32_0 = arith.constant 0 : i32
    return %arg0, %c0_i32 : i32, i32
  }
}

module attributes {stable_mosaic.version = 11 : i64} {
  func.func @_dense_kernel(%arg0: i32, %arg1: i32, %arg2: i32, %arg3: memref<2x32xbf16, #tpu.memory_space<vmem>>, %arg4: memref<32x32xbf16, #tpu.memory_space<vmem>>, %arg5: memref<1x32xf32, #tpu.memory_space<vmem>>, %arg6: memref<2x32xf32, #tpu.memory_space<vmem>>, %arg7: memref<2x32xf32, #tpu.memory_space<vmem>>) attributes {dimension_semantics = [#tpu.dimension_semantics<parallel>, #tpu.dimension_semantics<parallel>, #tpu.dimension_semantics<arbitrary>], iteration_bounds = array<i64: 1, 1, 1>, scalar_prefetch = 0 : i64, scratch_operands = 1 : i64, tpu.core_type = #tpu.core_type<tc>, window_params = [{transform_indices = @transform_0, window_bounds = array<i64: 2, 32>}, {transform_indices = @transform_1, window_bounds = array<i64: 32, 32>}, {transform_indices = @transform_2, window_bounds = array<i64: 1, 32>}, {transform_indices = @transform_3, window_bounds = array<i64: 2, 32>}]} {
    %c0_i32 = arith.constant 0 : i32
    %0 = arith.cmpi eq, %arg2, %c0_i32 : i32
    %1 = arith.extui %0 : i1 to i32
    %c0_i32_0 = arith.constant 0 : i32
    %2 = arith.cmpi ne, %1, %c0_i32_0 : i32
    scf.if %2 {
      %cst_10 = arith.constant 0.000000e+00 : f32
      %12 = vector.broadcast %cst_10 : f32 to vector<2x32xf32>
      %c0_11 = arith.constant 0 : index
      %c0_12 = arith.constant 0 : index
      %13 = vector.load %arg7[%c0_11, %c0_12] : memref<2x32xf32, #tpu.memory_space<vmem>>, vector<2x32xf32>
      tpu.vector_store %arg7[%c0_11, %c0_12], %12 {strides = array<i32>} : memref<2x32xf32, #tpu.memory_space<vmem>>, vector<2x32xf32>,
    } else {
    }
    %c0 = arith.constant 0 : index
    %c0_1 = arith.constant 0 : index
    %3 = vector.load %arg7[%c0, %c0_1] : memref<2x32xf32, #tpu.memory_space<vmem>>, vector<2x32xf32>
    %c0_2 = arith.constant 0 : index
    %c0_3 = arith.constant 0 : index
    %4 = vector.load %arg3[%c0_2, %c0_3] : memref<2x32xbf16, #tpu.memory_space<vmem>>, vector<2x32xbf16>
    %c0_4 = arith.constant 0 : index
    %c0_5 = arith.constant 0 : index
    %5 = vector.load %arg4[%c0_4, %c0_5] : memref<32x32xbf16, #tpu.memory_space<vmem>>, vector<32x32xbf16>
    %cst = arith.constant dense<0.000000e+00> : vector<2x32xf32>
    %6 = tpu.matmul %4, %5, %cst {dimension_numbers = #tpu.dot_dimension_numbers<[1], [0], [0], [1], [0, 0, 1, 1], [], []>} : vector<2x32xbf16>, vector<32x32xbf16>, vector<2x32xf32> -> vector<2x32xf32>
    %7 = arith.addf %3, %6 : vector<2x32xf32>
    %c0_6 = arith.constant 0 : index
    %c0_7 = arith.constant 0 : index
    %8 = vector.load %arg7[%c0_6, %c0_7] : memref<2x32xf32, #tpu.memory_space<vmem>>, vector<2x32xf32>
    tpu.vector_store %arg7[%c0_6, %c0_7], %7 {strides = array<i32>} : memref<2x32xf32, #tpu.memory_space<vmem>>, vector<2x32xf32>,
    %c0_i32_8 = arith.constant 0 : i32
    %9 = arith.cmpi eq, %arg2, %c0_i32_8 : i32
    %10 = arith.extui %9 : i1 to i32
    %c0_i32_9 = arith.constant 0 : i32
    %11 = arith.cmpi ne, %10, %c0_i32_9 : i32
    scf.if %11 {
      %c0_10 = arith.constant 0 : index
      %c0_11 = arith.constant 0 : index
      %12 = vector.load %arg7[%c0_10, %c0_11] : memref<2x32xf32, #tpu.memory_space<vmem>>, vector<2x32xf32>
      %c0_12 = arith.constant 0 : index
      %c0_13 = arith.constant 0 : index
      %13 = vector.load %arg5[%c0_12, %c0_13] : memref<1x32xf32, #tpu.memory_space<vmem>>, vector<1x32xf32>
      %14 = vector.broadcast %13 : vector<1x32xf32> to vector<2x32xf32>
      %15 = arith.addf %12, %14 : vector<2x32xf32>
      %16 = math.tanh %15 : vector<2x32xf32>
      %c0_14 = arith.constant 0 : index
      %c0_15 = arith.constant 0 : index
      %17 = vector.load %arg6[%c0_14, %c0_15] : memref<2x32xf32, #tpu.memory_space<vmem>>, vector<2x32xf32>
      tpu.vector_store %arg6[%c0_14, %c0_15], %16 {strides = array<i32>} : memref<2x32xf32, #tpu.memory_space<vmem>>, vector<2x32xf32>,
    } else {
    }
    return
  }
  func.func @transform_0(%arg0: i32, %arg1: i32, %arg2: i32) -> (i32, i32) {
    %c0_i32 = arith.constant 0 : i32
    return %arg0, %arg2 : i32, i32
  }
  func.func @transform_1(%arg0: i32, %arg1: i32, %arg2: i32) -> (i32, i32) {
    %c0_i32 = arith.constant 0 : i32
    return %arg2, %arg1 : i32, i32
  }
  func.func @transform_2(%arg0: i32, %arg1: i32, %arg2: i32) -> (i32, i32) {
    %c0_i32 = arith.constant 0 : i32
    %c0_i32_0 = arith.constant 0 : i32
    return %c0_i32, %arg1 : i32, i32
  }
  func.func @transform_3(%arg0: i32, %arg1: i32, %arg2: i32) -> (i32, i32) {
    %c0_i32 = arith.constant 0 : i32
    return %arg0, %arg1 : i32, i32
  }
}

</mosaic_0001>

<llo_original>
// kernel: chat_model_forward.17
$region0: #{chat_model_forward.17}
  #allocation0 [shape = 'u32[]', space=smem, size = 0x4, offset = 0x4, fixed_abs, tag = 'smem constant byte address 0x4 - core index']
  #allocation1 [shape = 'u32[72,128]{1,0:T(1,128)}', space=vmem, size = 0x9000, scoped, tag = 'internal scratch']
  #allocation2 [shape = 'f32[16,32]{1,0:T(8,128)}', space=vmem, size = 0x2000, scoped, tag = 'scratch operand']
  %s0 = inlined_call_operand.vmem [shape: bf16[16,32], index: 0, kind: input, shape index: {}]
  %s1 = inlined_call_operand.vmem [shape: bf16[32,32], index: 1, kind: input, shape index: {}]
  %s2 = inlined_call_operand.vmem [shape: f32[1,32], index: 2, kind: input, shape index: {}]
  %s3 = inlined_call_operand.vmem [shape: bf16[16,32], index: 3, kind: input, shape index: {}]
  %s4 = inlined_call_operand.vmem [shape: bf16[16,32], index: 4, kind: output, shape index: {}]
  %s5 = sld [smem:[#allocation0]]
  $region34: #{chat_model_forward.17} parent=0
    _
  %s7 = ssub.s32 1, %s5
  %s8 = scalar_select 0, %s7, %s5
  // Predicated region
  $region2: #{chat_model_forward.17} parent=0 // pred_check
    _
  $region3: #{chat_model_forward.17} parent=0 // pred_check_branch
    %10 = sbr.rel (0) target = $region5
  $region4: #{chat_model_forward.17} parent=0 // pred_region
    _
  $region5: #{chat_model_forward.17} parent=0 // pred_fallthru
    _
  // Predicated region
  $region6: #{chat_model_forward.17} parent=0 // pred_check
    _
  $region7: #{chat_model_forward.17} parent=0 // pred_check_branch
    %12 = sbr.rel (0) target = $region9
  $region8: #{chat_model_forward.17} parent=0 // pred_region
    _
  $region9: #{chat_model_forward.17} parent=0 // pred_fallthru
    _
  // Predicated region
  $region10: #{chat_model_forward.17} parent=0 // pred_check
    _
  $region11: #{chat_model_forward.17} parent=0 // pred_check_branch
    %14 = sbr.rel (0) target = $region13
  $region12: #{chat_model_forward.17} parent=0 // pred_region
    _
  $region13: #{chat_model_forward.17} parent=0 // pred_fallthru
    _
  // Predicated region
  $region14: #{chat_model_forward.17} parent=0 // pred_check
    _
  $region15: #{chat_model_forward.17} parent=0 // pred_check_branch
    %16 = sbr.rel (0) target = $region17
  $region16: #{chat_model_forward.17} parent=0 // pred_region
    _
  $region17: #{chat_model_forward.17} parent=0 // pred_fallthru
    _
  %p18 = scmp.eq.s32.totalorder 0, 0
  // Predicated region
  $region18: #{chat_model_forward.17} parent=0 // pred_check
    %p19 = pneg %p18
  $region19: #{chat_model_forward.17} parent=0 // pred_check_branch
    %21 = sbr.rel (%p19) target = $region21
  $region20: #{chat_model_forward.17} parent=0 // pred_region
    %vm22 = vcmask 261120
    %23 = vst.msk [vmem:[#allocation2] sm:$0xff] %vm22, 0.0
    %24 = vst.msk [vmem:[#allocation2 + $0x8] sm:$0xff] %vm22, 0.0
  $region21: #{chat_model_forward.17} parent=0 // pred_fallthru
    _
  %v25 = vld [vmem:[#allocation2] sm:$0xff]
  %v26 = vld [vmem:[#allocation2 + $0x8] sm:$0xff]
  %v27 = vld [vmem:[%s0] sm:$0xf]
  %v28 = vld [vmem:[%s0 + $0x4] sm:$0xf]
  %v29 = vld [vmem:[%s1] sm:$0xf]
  %v30 = vld [vmem:[%s1 + $0x4] sm:$0xf]
  %v31 = vld [vmem:[%s1 + $0x8] sm:$0xf]
  %v32 = vld [vmem:[%s1 + $0xc] sm:$0xf]
  %v35 = vunpack.c.l.b16 %v27
  %v36 = vunpack.c.l.b16 %v28
  %v37 = vpack.c.b16 %v36, %v35
  %v42 = vunpack.c.l.b16 %v29
  %v43 = vunpack.c.l.b16 %v30
  %v44 = vunpack.c.l.b16 %v31
  %v45 = vunpack.c.l.b16 %v32
  %v46 = vpack.c.b16 %v43, %v42
  %v47 = vpack.c.b16 %v45, %v44
  %vm50 = vcmask 261120
  %v52 = vsel %vm50, %v37, 0
  %54 = vmatpush.bf16.msra.mxu0 0
  %55 = vmatpush.bf16.msra.mxu0 0
  %56 = vmatpush.bf16.msra.mxu0 0
  %57 = vmatpush.bf16.msra.mxu0 0
  %58 = vmatpush.bf16.msra.mxu0 0
  %59 = vmatpush.bf16.msra.mxu0 0
  %60 = vmatpush.bf16.msra.mxu0 %v47
  %61 = vmatpush.bf16.msra.mxu0 %v46
  %62 = vmatmul.bf16.gmra.mxu0 %v52
  %v63 = vpop.f32.mrf.mxu0
  %v64 = vadd.f32 0.0, %v63
  %v65 = vpop.f32.mrf.mxu0
  %v66 = vadd.f32 0.0, %v65
  %67 = vdwg.mxu0
  %v68 = vadd.f32 %v25, %v64
  %v69 = vadd.f32 %v26, %v66
  %70 = vst.msk [vmem:[#allocation2] sm:$0xff] %vm50, %v68
  %71 = vst.msk [vmem:[#allocation2 + $0x8] sm:$0xff] %vm50, %v69
  // Predicated region
  $region22: #{chat_model_forward.17} parent=0 // pred_check
    %p72 = pneg %p18
  $region23: #{chat_model_forward.17} parent=0 // pred_check_branch
    %74 = sbr.rel (%p72) target = $region25
  $region24: #{chat_model_forward.17} parent=0 // pred_region
    %v75 = vld [vmem:[#allocation2] sm:$0xff]
    %v76 = vld [vmem:[#allocation2 + $0x8] sm:$0xff]
    %v77 = vld [vmem:[%s2] sm:$0x1]
    %v79 = vperm.slane %v77, 0
    %v81 = vadd.f32 %v75, %v79
    %v82 = vadd.f32 %v76, %v79
    %v83 = vld [vmem:[%s3] sm:$0xf]
    %v84 = vld [vmem:[%s3 + $0x4] sm:$0xf]
    %v85 = vunpack.c.l.bf16 %v83
    %v86 = vunpack.c.l.bf16 %v84
    %v87 = vadd.f32 %v81, %v85
    %v88 = vadd.f32 %v82, %v86
    %v89 = vpack.c.bf16 %v87, %v87
    %v90 = vpack.c.bf16 %v88, %v88
    %vm91 = vcmask 257024
    %92 = vst.msk [vmem:[%s4] sm:$0xf] %vm91, %v89
    %93 = vst.msk [vmem:[%s4 + $0x4] sm:$0xf] %vm91, %v90
  $region25: #{chat_model_forward.17} parent=0 // pred_fallthru
    _
  // Predicated region
  $region26: #{chat_model_forward.17} parent=0 // pred_check
    _
  $region27: #{chat_model_forward.17} parent=0 // pred_check_branch
    %95 = sbr.rel (0) target = $region29
  $region28: #{chat_model_forward.17} parent=0 // pred_region
    _
  $region29: #{chat_model_forward.17} parent=0 // pred_fallthru
    _
  // Predicated region
  $region30: #{chat_model_forward.17} parent=0 // pred_check
    _
  $region31: #{chat_model_forward.17} parent=0 // pred_check_branch
    %97 = sbr.rel (0) target = $region33
  $region32: #{chat_model_forward.17} parent=0 // pred_region
    _
  $region33: #{chat_model_forward.17} parent=0 // pred_fallthru
    _

// kernel: chat_model_forward.14
$region0: #{chat_model_forward.14}
  #allocation0 [shape = 'u32[]', space=smem, size = 0x4, offset = 0x4, fixed_abs, tag = 'smem constant byte address 0x4 - core index']
  #allocation1 [shape = 'u32[72,128]{1,0:T(1,128)}', space=vmem, size = 0x9000, scoped, tag = 'internal scratch']
  %s0 = inlined_call_operand.vmem [shape: f32[16,32], index: 0, kind: input, shape index: {}]
  %s1 = inlined_call_operand.vmem [shape: f32[1,32], index: 1, kind: input, shape index: {}]
  %s2 = inlined_call_operand.vmem [shape: f32[1,32], index: 2, kind: input, shape index: {}]
  %s3 = inlined_call_operand.vmem [shape: bf16[16,32], index: 3, kind: output, shape index: {}]
  %s4 = sld [smem:[#allocation0]]
  $region22: #{chat_model_forward.14} parent=0
    _
  %s6 = ssub.s32 1, %s4
  %s7 = scalar_select 0, %s6, %s4
  // Predicated region
  $region2: #{chat_model_forward.14} parent=0 // pred_check
    _
  $region3: #{chat_model_forward.14} parent=0 // pred_check_branch
    %9 = sbr.rel (0) target = $region5
  $region4: #{chat_model_forward.14} parent=0 // pred_region
    _
  $region5: #{chat_model_forward.14} parent=0 // pred_fallthru
    _
  // Predicated region
  $region6: #{chat_model_forward.14} parent=0 // pred_check
    _
  $region7: #{chat_model_forward.14} parent=0 // pred_check_branch
    %11 = sbr.rel (0) target = $region9
  $region8: #{chat_model_forward.14} parent=0 // pred_region
    _
  $region9: #{chat_model_forward.14} parent=0 // pred_fallthru
    _
  // Predicated region
  $region10: #{chat_model_forward.14} parent=0 // pred_check
    _
  $region11: #{chat_model_forward.14} parent=0 // pred_check_branch
    %13 = sbr.rel (0) target = $region13
  $region12: #{chat_model_forward.14} parent=0 // pred_region
    _
  $region13: #{chat_model_forward.14} parent=0 // pred_fallthru
    _
  %v14 = vld [vmem:[%s0] sm:$0xff]
  %v15 = vld [vmem:[%s0 + $0x8] sm:$0xff]
  %vm16 = vcmask 261120
  %v17 = vsel %vm16, %v14, 0.0
  %18 = vadd.xlane.f32.xlu0 %v17
  %v19 = vpop.xlane.xlu0 %18
  %v20 = vsel %vm16, %v15, 0.0
  %21 = vadd.xlane.f32.xlu0 %v20
  %v22 = vpop.xlane.xlu0 %21
  %v23 = vrcp.pop 32.0
  %v24 = vmul.f32 32.0, %v23
  %v25 = vsub.f32 1.0, %v24
  %v26 = vmul.f32 %v23, %v25
  %v27 = vadd.f32 %v23, %v26
  %vm28 = vweird.f32 %v23
  %v29 = vsel %vm28, %v23, %v27
  %v30 = vmul.f32 %v19, %v29
  %v31 = vmul.f32 %v22, %v29
  %v32 = vsub.f32 %v14, %v30
  %v33 = vsub.f32 %v15, %v31
  %v34 = vmul.f32 %v32, %v32
  %v35 = vmul.f32 %v33, %v33
  %v36 = vsel %vm16, %v34, 0.0
  %37 = vadd.xlane.f32.xlu0 %v36
  %v38 = vpop.xlane.xlu0 %37
  %v39 = vsel %vm16, %v35, 0.0
  %40 = vadd.xlane.f32.xlu0 %v39
  %v41 = vpop.xlane.xlu0 %40
  %v42 = vmul.f32 %v38, %v29
  %v43 = vmul.f32 %v41, %v29
  %v44 = vadd.f32 %v42, 1e-12
  %v45 = vadd.f32 %v43, 1e-12
  %v46 = vrsqrt.pop %v44
  %v47 = vmul.f32 %v46, %v44
  %v48 = vmul.f32 %v47, %v46
  %v49 = vmul.f32 0.5, %v48
  %v50 = vsub.f32 1.5, %v49
  %v51 = vmul.f32 %v46, %v50
  %vm52 = vweird.f32 %v44
  %vm53 = vweird.f32 %v46
  %vm54 = vmor %vm52, %vm53
  %v55 = vsel %vm54, %v46, %v51
  %v56 = vrsqrt.pop %v45
  %v57 = vmul.f32 %v56, %v45
  %v58 = vmul.f32 %v57, %v56
  %v59 = vmul.f32 0.5, %v58
  %v60 = vsub.f32 1.5, %v59
  %v61 = vmul.f32 %v56, %v60
  %vm62 = vweird.f32 %v45
  %vm63 = vweird.f32 %v56
  %vm64 = vmor %vm62, %vm63
  %v65 = vsel %vm64, %v56, %v61
  %v66 = vmul.f32 %v32, %v55
  %v67 = vmul.f32 %v33, %v65
  %v68 = vld [vmem:[%s1] sm:$0x1]
  %v70 = vperm.slane %v68, 0
  %v72 = vmul.f32 %v66, %v70
  %v73 = vmul.f32 %v67, %v70
  %v74 = vld [vmem:[%s2] sm:$0x1]
  %v76 = vperm.slane %v74, 0
  %v78 = vadd.f32 %v72, %v76
  %v79 = vadd.f32 %v73, %v76
  %v80 = vpack.c.bf16 %v78, %v78
  %v81 = vpack.c.bf16 %v79, %v79
  %vm82 = vcmask 257024
  %83 = vst.msk [vmem:[%s3] sm:$0xf] %vm82, %v80
  %84 = vst.msk [vmem:[%s3 + $0x4] sm:$0xf] %vm82, %v81
  // Predicated region
  $region14: #{chat_model_forward.14} parent=0 // pred_check
    _
  $region15: #{chat_model_forward.14} parent=0 // pred_check_branch
    %86 = sbr.rel (0) target = $region17
  $region16: #{chat_model_forward.14} parent=0 // pred_region
    _
  $region17: #{chat_model_forward.14} parent=0 // pred_fallthru
    _
  // Predicated region
  $region18: #{chat_model_forward.14} parent=0 // pred_check
    _
  $region19: #{chat_model_forward.14} parent=0 // pred_check_branch
    %88 = sbr.rel (0) target = $region21
  $region20: #{chat_model_forward.14} parent=0 // pred_region
    _
  $region21: #{chat_model_forward.14} parent=0 // pred_fallthru
    _

// kernel: chat_model_forward.15
$region0: #{chat_model_forward.15}
  #allocation0 [shape = 'u32[]', space=smem, size = 0x4, offset = 0x4, fixed_abs, tag = 'smem constant byte address 0x4 - core index']
  #allocation1 [shape = 'u32[72,128]{1,0:T(1,128)}', space=vmem, size = 0x9000, scoped, tag = 'internal scratch']
  #allocation2 [shape = 'f32[16,96]{1,0:T(8,128)}', space=vmem, size = 0x2000, scoped, tag = 'scratch operand']
  %s0 = inlined_call_operand.vmem [shape: bf16[16,32], index: 0, kind: input, shape index: {}]
  %s1 = inlined_call_operand.vmem [shape: bf16[32,96], index: 1, kind: input, shape index: {}]
  %s2 = inlined_call_operand.vmem [shape: f32[1,96], index: 2, kind: input, shape index: {}]
  %s3 = inlined_call_operand.vmem [shape: bf16[16,96], index: 3, kind: output, shape index: {}]
  %s4 = sld [smem:[#allocation0]]
  $region30: #{chat_model_forward.15} parent=0
    _
  %s6 = ssub.s32 1, %s4
  %s7 = scalar_select 0, %s6, %s4
  // Predicated region
  $region2: #{chat_model_forward.15} parent=0 // pred_check
    _
  $region3: #{chat_model_forward.15} parent=0 // pred_check_branch
    %9 = sbr.rel (0) target = $region5
  $region4: #{chat_model_forward.15} parent=0 // pred_region
    _
  $region5: #{chat_model_forward.15} parent=0 // pred_fallthru
    _
  // Predicated region
  $region6: #{chat_model_forward.15} parent=0 // pred_check
    _
  $region7: #{chat_model_forward.15} parent=0 // pred_check_branch
    %11 = sbr.rel (0) target = $region9
  $region8: #{chat_model_forward.15} parent=0 // pred_region
    _
  $region9: #{chat_model_forward.15} parent=0 // pred_fallthru
    _
  // Predicated region
  $region10: #{chat_model_forward.15} parent=0 // pred_check
    _
  $region11: #{chat_model_forward.15} parent=0 // pred_check_branch
    %13 = sbr.rel (0) target = $region13
  $region12: #{chat_model_forward.15} parent=0 // pred_region
    _
  $region13: #{chat_model_forward.15} parent=0 // pred_fallthru
    _
  %p15 = scmp.eq.s32.totalorder 0, 0
  // Predicated region
  $region14: #{chat_model_forward.15} parent=0 // pred_check
    %p16 = pneg %p15
  $region15: #{chat_model_forward.15} parent=0 // pred_check_branch
    %18 = sbr.rel (%p16) target = $region17
  $region16: #{chat_model_forward.15} parent=0 // pred_region
    %vm19 = vcmask 785408
    %20 = vst.msk [vmem:[#allocation2] sm:$0xff] %vm19, 0.0
    %21 = vst.msk [vmem:[#allocation2 + $0x8] sm:$0xff] %vm19, 0.0
  $region17: #{chat_model_forward.15} parent=0 // pred_fallthru
    _
  %v22 = vld [vmem:[#allocation2] sm:$0xff]
  %v23 = vld [vmem:[#allocation2 + $0x8] sm:$0xff]
  %v24 = vld [vmem:[%s0] sm:$0xf]
  %v25 = vld [vmem:[%s0 + $0x4] sm:$0xf]
  %v26 = vld [vmem:[%s1] sm:$0xf]
  %v27 = vld [vmem:[%s1 + $0x4] sm:$0xf]
  %v28 = vld [vmem:[%s1 + $0x8] sm:$0xf]
  %v29 = vld [vmem:[%s1 + $0xc] sm:$0xf]
  %v32 = vunpack.c.l.b16 %v24
  %v33 = vunpack.c.l.b16 %v25
  %v34 = vpack.c.b16 %v33, %v32
  %v39 = vunpack.c.l.b16 %v26
  %v40 = vunpack.c.l.b16 %v27
  %v41 = vunpack.c.l.b16 %v28
  %v42 = vunpack.c.l.b16 %v29
  %v43 = vpack.c.b16 %v40, %v39
  %v44 = vpack.c.b16 %v42, %v41
  %vm47 = vcmask 261120
  %v49 = vsel %vm47, %v34, 0
  %51 = vmatpush.bf16.msra.mxu0 0
  %52 = vmatpush.bf16.msra.mxu0 0
  %53 = vmatpush.bf16.msra.mxu0 0
  %54 = vmatpush.bf16.msra.mxu0 0
  %55 = vmatpush.bf16.msra.mxu0 0
  %56 = vmatpush.bf16.msra.mxu0 0
  %57 = vmatpush.bf16.msra.mxu0 %v44
  %58 = vmatpush.bf16.msra.mxu0 %v43
  %59 = vmatmul.bf16.gmra.mxu0 %v49
  %v60 = vpop.f32.mrf.mxu0
  %v61 = vadd.f32 0.0, %v60
  %v62 = vpop.f32.mrf.mxu0
  %v63 = vadd.f32 0.0, %v62
  %64 = vdwg.mxu0
  %v65 = vadd.f32 %v22, %v61
  %v66 = vadd.f32 %v23, %v63
  %vm67 = vcmask 785408
  %68 = vst.msk [vmem:[#allocation2] sm:$0xff] %vm67, %v65
  %69 = vst.msk [vmem:[#allocation2 + $0x8] sm:$0xff] %vm67, %v66
  // Predicated region
  $region18: #{chat_model_forward.15} parent=0 // pred_check
    %p70 = pneg %p15
  $region19: #{chat_model_forward.15} parent=0 // pred_check_branch
    %72 = sbr.rel (%p70) target = $region21
  $region20: #{chat_model_forward.15} parent=0 // pred_region
    %v73 = vld [vmem:[#allocation2] sm:$0xff]
    %v74 = vld [vmem:[#allocation2 + $0x8] sm:$0xff]
    %v75 = vld [vmem:[%s2] sm:$0x1]
    %v77 = vperm.slane %v75, 0
    %v79 = vadd.f32 %v73, %v77
    %v80 = vadd.f32 %v74, %v77
    %v81 = vpack.c.bf16 %v79, %v79
    %v82 = vpack.c.bf16 %v80, %v80
    %vm83 = vcmask 781312
    %84 = vst.msk [vmem:[%s3] sm:$0xf] %vm83, %v81
    %85 = vst.msk [vmem:[%s3 + $0x4] sm:$0xf] %vm83, %v82
  $region21: #{chat_model_forward.15} parent=0 // pred_fallthru
    _
  // Predicated region
  $region22: #{chat_model_forward.15} parent=0 // pred_check
    _
  $region23: #{chat_model_forward.15} parent=0 // pred_check_branch
    %87 = sbr.rel (0) target = $region25
  $region24: #{chat_model_forward.15} parent=0 // pred_region
    _
  $region25: #{chat_model_forward.15} parent=0 // pred_fallthru
    _
  // Predicated region
  $region26: #{chat_model_forward.15} parent=0 // pred_check
    _
  $region27: #{chat_model_forward.15} parent=0 // pred_check_branch
    %89 = sbr.rel (0) target = $region29
  $region28: #{chat_model_forward.15} parent=0 // pred_region
    _
  $region29: #{chat_model_forward.15} parent=0 // pred_fallthru
    _

// kernel: chat_model_forward.16
$region0: #{chat_model_forward.16}
  #allocation0 [shape = 'u32[]', space=smem, size = 0x4, offset = 0x4, fixed_abs, tag = 'smem constant byte address 0x4 - core index']
  #allocation1 [shape = 'u32[72,128]{1,0:T(1,128)}', space=vmem, size = 0x9000, scoped, tag = 'internal scratch']
  #allocation2 [shape = 'f32[8,32]{1,0:T(8,128)}', space=vmem, size = 0x1000, scoped, tag = 'scratch operand']
  %s0 = inlined_call_operand.vmem [shape: bf16[2,8,96], index: 0, kind: input, shape index: {}]
  %s1 = inlined_call_operand.vmem [shape: bf16[2,8,32], index: 1, kind: output, shape index: {}]
  %s2 = sld [smem:[#allocation0]]
  $region37: #{chat_model_forward.16} parent=0
    _
  %s4 = ssub.s32 1, %s2
  %s5 = scalar_select 0, %s4, %s2
  loop: start=0, step=1, limit=4
  $region2: #{chat_model_forward.16} parent=0 // loop_pre_header
    _
  $region3: #{chat_model_forward.16} parent=0 // loop_header
    %s7 = sphi 0, %s11
    %p8 = scmp.ge.s32.totalorder %s7, 4
    %s17 = sphi 0, %s19
    %s20 = sphi 0, %s17
    %s21 = sphi 0, %s20
    %s37 = sphi 0, %s21
    %s43 = sphi 0, %s45
    %s46 = sphi 0, %s43
    %s47 = sphi 0, %s46
    %s63 = sphi 0, %s47
  $region4: #{chat_model_forward.16} parent=0 // loop_header_branch
    %10 = sbr.rel (%p8) target = $region8
  $region5: #{chat_model_forward.16} parent=0 // loop_body
    %s12 = ssub.s32 %s7, 1
    %s13 = ssub.s32 %s7, 2
    %s14 = sadd.s32 %s7, 1
    %s15 = ssub.s32 %s7, %s14
    %p16 = scmp.eq.s32.totalorder %s15, 0
    %s18 = sadd.s32 %s17, 1
    %s19 = scalar_select %p16, %s17, %s18
    %p22 = pneg %p16
    %p23 = scmp.eq.s32.totalorder %s7, 1
    %p24 = por %p22, %p23
    %p25 = scmp.ne.s32.totalorder %s17, %s20
    %p26 = scmp.eq.s32.totalorder %s7, 0
    %p27 = por %p25, %p26
    %p28 = scmp.ne.s32.totalorder %s17, %s20
    %p29 = scmp.eq.s32.totalorder %s12, 1
    %p30 = por %p28, %p29
    %p31 = scmp.ne.s32.totalorder %s20, %s21
    %p32 = scmp.eq.s32.totalorder %s12, 0
    %p33 = por %p31, %p32
    %p34 = scmp.ne.s32.totalorder %s20, %s21
    %p35 = scmp.eq.s32.totalorder %s13, 1
    %p36 = por %p34, %p35
    %p38 = scmp.ne.s32.totalorder %s21, %s37
    %p39 = scmp.eq.s32.totalorder %s13, 0
    %p40 = por %p38, %p39
    %s41 = ssub.s32 %s7, %s14
    %p42 = scmp.eq.s32.totalorder %s41, 0
    %s44 = sadd.s32 %s43, 1
    %s45 = scalar_select %p42, %s43, %s44
    %p48 = pneg %p42
    %p49 = scmp.eq.s32.totalorder %s7, 1
    %p50 = por %p48, %p49
    %p51 = scmp.ne.s32.totalorder %s43, %s46
    %p52 = scmp.eq.s32.totalorder %s7, 0
    %p53 = por %p51, %p52
    %p54 = scmp.ne.s32.totalorder %s43, %s46
    %p55 = scmp.eq.s32.totalorder %s12, 1
    %p56 = por %p54, %p55
    %p57 = scmp.ne.s32.totalorder %s46, %s47
    %p58 = scmp.eq.s32.totalorder %s12, 0
    %p59 = por %p57, %p58
    %p60 = scmp.ne.s32.totalorder %s46, %s47
    %p61 = scmp.eq.s32.totalorder %s13, 1
    %p62 = por %p60, %p61
    %p64 = scmp.ne.s32.totalorder %s47, %s63
    %p65 = scmp.eq.s32.totalorder %s13, 0
    %p66 = por %p64, %p65
    %p67 = scmp.le.s32.totalorder 1, %s7
    %p68 = scmp.lt.s32.totalorder %s7, 3
    %p69 = pnand %p67, %p68
    %p70 = pneg %p69
    // Predicated region
    $region9: #{chat_model_forward.16} parent=5 // pred_check
      _
    $region10: #{chat_model_forward.16} parent=5 // pred_check_branch
      %72 = sbr.rel (%p69) target = $region12
    $region11: #{chat_model_forward.16} parent=5 // pred_region
      %s73 = ssub.s32 %s7, 1
    $region12: #{chat_model_forward.16} parent=5 // pred_fallthru
      _
    %p74 = scmp.lt.s32.totalorder %s7, 2
    // Predicated region
    $region13: #{chat_model_forward.16} parent=5 // pred_check
      %p75 = pneg %p74
    $region14: #{chat_model_forward.16} parent=5 // pred_check_branch
      %77 = sbr.rel (%p75) target = $region16
    $region15: #{chat_model_forward.16} parent=5 // pred_region
      // Predicated region
      $region17: #{chat_model_forward.16} parent=15 // pred_check
        %p78 = pneg %p27
      $region18: #{chat_model_forward.16} parent=15 // pred_check_branch
        %80 = sbr.rel (%p78) target = $region20
      $region19: #{chat_model_forward.16} parent=15 // pred_region
        %p81 = scmp.lt.s32.totalorder %s7, 1
        %s82 = scalar_select %p81, %s7, 1
        %s83 = smul.addr %s82, 4
        %s84 = scalar_lea.vmem %s0, %s83
      $region20: #{chat_model_forward.16} parent=15 // pred_fallthru
        _
    $region16: #{chat_model_forward.16} parent=5 // pred_fallthru
      _
    %p85 = scmp.le.s32.totalorder 1, %s7
    %p86 = scmp.lt.s32.totalorder %s7, 3
    %p87 = pnand %p85, %p86
    %p88 = pneg %p87
    // Predicated region
    $region21: #{chat_model_forward.16} parent=5 // pred_check
      _
    $region22: #{chat_model_forward.16} parent=5 // pred_check_branch
      %90 = sbr.rel (%p87) target = $region24
    $region23: #{chat_model_forward.16} parent=5 // pred_region
      %s91 = ssub.s32 %s7, 1
      %p92 = scmp.lt.s32.totalorder %s12, 1
      %s93 = scalar_select %p92, %s12, 1
      %s94 = smul.addr %s93, 4
      %s95 = scalar_lea.vmem %s0, %s94
      %p96 = pneg %p33
      %p97 = pneg %p30
      %p98 = pneg %p59
      %p99 = pneg %p56
      %p100 = scmp.lt.s32.totalorder %s12, 1
      %s101 = scalar_select %p100, %s12, 1
      %s102 = smul.addr %s101, 4
      %s103 = scalar_lea.vmem %s1, %s102
      %p104 = scmp.lt.s32.totalorder %s12, 1
      %s105 = scalar_select %p104, %s12, 1
      %s106 = smul.addr %s105, 4
      %s107 = scalar_lea.vmem %s0, %s106
      %p108 = scmp.lt.s32.totalorder %s12, 1
      %s109 = scalar_select %p108, %s12, 1
      %s110 = smul.addr %s109, 4
      %s111 = scalar_lea.vmem %s1, %s110
      %v113 = vld [vmem:[%s107] sm:$0xf]
      %v115 = vunpack.c.l.b16 %v113
      %v116 = vpack.c.b16 %v115, %v115
      %117 = vrot.lane.b32.xlu0 %v116, 96
      %v118 = vpop.permute.xlu0 %117
      %vm119 = vcmask 64512
      %v121 = vsel %vm119, %v113, 0
      %v124 = vsel %vm119, %v118, 0
      %126 = vmatpush.bf16.xpose.msra.mxu0 0
      %127 = vmatpush.bf16.xpose.msra.mxu0 0
      %128 = vmatpush.bf16.xpose.msra.mxu0 0
      %129 = vmatpush.bf16.xpose.msra.mxu0 0
      %130 = vmatpush.bf16.xpose.msra.mxu0 0
      %131 = vmatpush.bf16.xpose.msra.mxu0 0
      %132 = vmatpush.bf16.xpose.msra.mxu0 0
      %133 = vmatpush.bf16.xpose.msra.mxu0 %v124
      %134 = vmatmul.bf16.gmra.mxu0 %v121
      %v135 = vpop.f32.mrf.mxu0
      %v136 = vadd.f32 0.0, %v135
      %v137 = vpop.f32.mrf.mxu0
      %138 = vdwg.mxu0
      %v139 = vsel %vm119, %v136, -inf
      %140 = vmax.xlane.f32.xlu0 %v139
      %v141 = vpop.xlane.xlu0 %140
      %v142 = vsub.f32 %v136, %v141
      %v143 = vmul.f32 %v142, 1.442695
      %v144 = vpow.pop %v143
      %v145 = vsel %vm119, %v144, 0.0
      %146 = vadd.xlane.f32.xlu0 %v145
      %v147 = vpop.xlane.xlu0 %146
      %v148 = vrcp.pop %v147
      %v149 = vmul.f32 %v144, %v148
      %v150 = vpack.c.bf16 %v149, %v149
      %151 = vrot.lane.b32.xlu0 %v116, 64
      %v152 = vpop.permute.xlu0 %151
      %v154 = vsel %vm119, %v150, 0
      %vm156 = vcmask 1043456
      %v158 = vsel %vm156, %v152, 0
      %160 = vmatpush.bf16.msra.mxu0 0
      %161 = vmatpush.bf16.msra.mxu0 0
      %162 = vmatpush.bf16.msra.mxu0 0
      %163 = vmatpush.bf16.msra.mxu0 0
      %164 = vmatpush.bf16.msra.mxu0 0
      %165 = vmatpush.bf16.msra.mxu0 0
      %166 = vmatpush.bf16.msra.mxu0 0
      %167 = vmatpush.bf16.msra.mxu0 %v158
      %168 = vmatmul.bf16.gmra.mxu0 %v154
      %v169 = vpop.f32.mrf.mxu0
      %v170 = vadd.f32 0.0, %v169
      %v171 = vpop.f32.mrf.mxu0
      %172 = vdwg.mxu0
      %173 = vst.msk [vmem:[#allocation2] sm:$0xff] %vm119, %v170
      %174 = vrot.lane.b32.xlu0 %v116, 120
      %v175 = vpop.permute.xlu0 %174
      %176 = vrot.lane.b32.xlu0 %v116, 88
      %v177 = vpop.permute.xlu0 %176
      %v179 = vsel %vm119, %v175, 0
      %v182 = vsel %vm119, %v177, 0
      %184 = vmatpush.bf16.xpose.msra.mxu0 0
      %185 = vmatpush.bf16.xpose.msra.mxu0 0
      %186 = vmatpush.bf16.xpose.msra.mxu0 0
      %187 = vmatpush.bf16.xpose.msra.mxu0 0
      %188 = vmatpush.bf16.xpose.msra.mxu0 0
      %189 = vmatpush.bf16.xpose.msra.mxu0 0
      %190 = vmatpush.bf16.xpose.msra.mxu0 0
      %191 = vmatpush.bf16.xpose.msra.mxu0 %v182
      %192 = vmatmul.bf16.gmra.mxu0 %v179
      %v193 = vpop.f32.mrf.mxu0
      %v194 = vadd.f32 0.0, %v193
      %v195 = vpop.f32.mrf.mxu0
      %196 = vdwg.mxu0
      %v197 = vsel %vm119, %v194, -inf
      %198 = vmax.xlane.f32.xlu0 %v197
      %v199 = vpop.xlane.xlu0 %198
      %v200 = vsub.f32 %v194, %v199
      %v201 = vmul.f32 %v200, 1.442695
      %v202 = vpow.pop %v201
      %v203 = vsel %vm119, %v202, 0.0
      %204 = vadd.xlane.f32.xlu0 %v203
      %v205 = vpop.xlane.xlu0 %204
      %v206 = vrcp.pop %v205
      %v207 = vmul.f32 %v202, %v206
      %v208 = vpack.c.bf16 %v207, %v207
      %209 = vrot.lane.b32.xlu0 %v116, 56
      %v210 = vpop.permute.xlu0 %209
      %v212 = vsel %vm119, %v208, 0
      %v215 = vsel %vm156, %v210, 0
      %217 = vmatpush.bf16.msra.mxu0 0
      %218 = vmatpush.bf16.msra.mxu0 0
      %219 = vmatpush.bf16.msra.mxu0 0
      %220 = vmatpush.bf16.msra.mxu0 0
      %221 = vmatpush.bf16.msra.mxu0 0
      %222 = vmatpush.bf16.msra.mxu0 0
      %223 = vmatpush.bf16.msra.mxu0 0
      %224 = vmatpush.bf16.msra.mxu0 %v215
      %225 = vmatmul.bf16.gmra.mxu0 %v212
      %v226 = vpop.f32.mrf.mxu0
      %v227 = vadd.f32 0.0, %v226
      %v228 = vpop.f32.mrf.mxu0
      %229 = vdwg.mxu0
      %231 = vrot.lane.b32.xlu0 %v227, 8
      %v232 = vpop.permute.xlu0 %231
      %vm234 = vcmask 130112
      %235 = vst.msk [vmem:[#allocation2] sm:$0xff] %vm234, %v232
      %236 = vrot.lane.b32.xlu0 %v116, 112
      %v237 = vpop.permute.xlu0 %236
      %238 = vrot.lane.b32.xlu0 %v116, 80
      %v239 = vpop.permute.xlu0 %238
      %v241 = vsel %vm119, %v237, 0
      %v244 = vsel %vm119, %v239, 0
      %246 = vmatpush.bf16.xpose.msra.mxu0 0
      %247 = vmatpush.bf16.xpose.msra.mxu0 0
      %248 = vmatpush.bf16.xpose.msra.mxu0 0
      %249 = vmatpush.bf16.xpose.msra.mxu0 0
      %250 = vmatpush.bf16.xpose.msra.mxu0 0
      %251 = vmatpush.bf16.xpose.msra.mxu0 0
      %252 = vmatpush.bf16.xpose.msra.mxu0 0
      %253 = vmatpush.bf16.xpose.msra.mxu0 %v244
      %254 = vmatmul.bf16.gmra.mxu0 %v241
      %v255 = vpop.f32.mrf.mxu0
      %v256 = vadd.f32 0.0, %v255
      %v257 = vpop.f32.mrf.mxu0
      %258 = vdwg.mxu0
      %v259 = vsel %vm119, %v256, -inf
      %260 = vmax.xlane.f32.xlu0 %v259
      %v261 = vpop.xlane.xlu0 %260
      %v262 = vsub.f32 %v256, %v261
      %v263 = vmul.f32 %v262, 1.442695
      %v264 = vpow.pop %v263
      %v265 = vsel %vm119, %v264, 0.0
      %266 = vadd.xlane.f32.xlu0 %v265
      %v267 = vpop.xlane.xlu0 %266
      %v268 = vrcp.pop %v267
      %v269 = vmul.f32 %v264, %v268
      %v270 = vpack.c.bf16 %v269, %v269
      %271 = vrot.lane.b32.xlu0 %v116, 48
      %v272 = vpop.permute.xlu0 %271
      %v274 = vsel %vm119, %v270, 0
      %v277 = vsel %vm156, %v272, 0
      %279 = vmatpush.bf16.msra.mxu0 0
      %280 = vmatpush.bf16.msra.mxu0 0
      %281 = vmatpush.bf16.msra.mxu0 0
      %282 = vmatpush.bf16.msra.mxu0 0
      %283 = vmatpush.bf16.msra.mxu0 0
      %284 = vmatpush.bf16.msra.mxu0 0
      %285 = vmatpush.bf16.msra.mxu0 0
      %286 = vmatpush.bf16.msra.mxu0 %v277
      %287 = vmatmul.bf16.gmra.mxu0 %v274
      %v288 = vpop.f32.mrf.mxu0
      %v289 = vadd.f32 0.0, %v288
      %v290 = vpop.f32.mrf.mxu0
      %291 = vdwg.mxu0
      %293 = vrot.lane.b32.xlu0 %v289, 16
      %v294 = vpop.permute.xlu0 %293
      %vm296 = vcmask 195712
      %297 = vst.msk [vmem:[#allocation2] sm:$0xff] %vm296, %v294
      %298 = vrot.lane.b32.xlu0 %v116, 104
      %v299 = vpop.permute.xlu0 %298
      %300 = vrot.lane.b32.xlu0 %v116, 72
      %v301 = vpop.permute.xlu0 %300
      %v303 = vsel %vm119, %v299, 0
      %v306 = vsel %vm119, %v301, 0
      %308 = vmatpush.bf16.xpose.msra.mxu0 0
      %309 = vmatpush.bf16.xpose.msra.mxu0 0
      %310 = vmatpush.bf16.xpose.msra.mxu0 0
      %311 = vmatpush.bf16.xpose.msra.mxu0 0
      %312 = vmatpush.bf16.xpose.msra.mxu0 0
      %313 = vmatpush.bf16.xpose.msra.mxu0 0
      %314 = vmatpush.bf16.xpose.msra.mxu0 0
      %315 = vmatpush.bf16.xpose.msra.mxu0 %v306
      %316 = vmatmul.bf16.gmra.mxu0 %v303
      %v317 = vpop.f32.mrf.mxu0
      %v318 = vadd.f32 0.0, %v317
      %v319 = vpop.f32.mrf.mxu0
      %320 = vdwg.mxu0
      %v321 = vsel %vm119, %v318, -inf
      %322 = vmax.xlane.f32.xlu0 %v321
      %v323 = vpop.xlane.xlu0 %322
      %v324 = vsub.f32 %v318, %v323
      %v325 = vmul.f32 %v324, 1.442695
      %v326 = vpow.pop %v325
      %v327 = vsel %vm119, %v326, 0.0
      %328 = vadd.xlane.f32.xlu0 %v327
      %v329 = vpop.xlane.xlu0 %328
      %v330 = vrcp.pop %v329
      %v331 = vmul.f32 %v326, %v330
      %v332 = vpack.c.bf16 %v331, %v331
      %333 = vrot.lane.b32.xlu0 %v116, 40
      %v334 = vpop.permute.xlu0 %333
      %v336 = vsel %vm119, %v332, 0
      %v339 = vsel %vm156, %v334, 0
      %341 = vmatpush.bf16.msra.mxu0 0
      %342 = vmatpush.bf16.msra.mxu0 0
      %343 = vmatpush.bf16.msra.mxu0 0
      %344 = vmatpush.bf16.msra.mxu0 0
      %345 = vmatpush.bf16.msra.mxu0 0
      %346 = vmatpush.bf16.msra.mxu0 0
      %347 = vmatpush.bf16.msra.mxu0 0
      %348 = vmatpush.bf16.msra.mxu0 %v339
      %349 = vmatmul.bf16.gmra.mxu0 %v336
      %v350 = vpop.f32.mrf.mxu0
      %v351 = vadd.f32 0.0, %v350
      %v352 = vpop.f32.mrf.mxu0
      %353 = vdwg.mxu0
      %355 = vrot.lane.b32.xlu0 %v351, 24
      %v356 = vpop.permute.xlu0 %355
      %vm358 = vcmask 261312
      %359 = vst.msk [vmem:[#allocation2] sm:$0xff] %vm358, %v356
      %v360 = vld [vmem:[#allocation2] sm:$0xff]
      %v361 = vpack.c.bf16 %v360, %v360
      %vm362 = vcmask 257024
      %363 = vst.msk [vmem:[%s111] sm:$0xf] %vm362, %v361
      %p364 = scmp.lt.s32.totalorder %s12, 1
      %s365 = scalar_select %p364, %s12, 1
      %s366 = smul.addr %s365, 4
      %s367 = scalar_lea.vmem %s1, %s366
      // Predicated region
      $region25: #{chat_model_forward.16} parent=23 // pred_check
        %p368 = pneg %p56
      $region26: #{chat_model_forward.16} parent=23 // pred_check_branch
        %370 = sbr.rel (%p368) target = $region28
      $region27: #{chat_model_forward.16} parent=23 // pred_region
        _
      $region28: #{chat_model_forward.16} parent=23 // pred_fallthru
        _
    $region24: #{chat_model_forward.16} parent=5 // pred_fallthru
      _
    %p371 = scmp.le.s32.totalorder 2, %s7
    // Predicated region
    $region29: #{chat_model_forward.16} parent=5 // pred_check
      %p372 = pneg %p371
    $region30: #{chat_model_forward.16} parent=5 // pred_check_branch
      %374 = sbr.rel (%p372) target = $region32
    $region31: #{chat_model_forward.16} parent=5 // pred_region
      %s375 = ssub.s32 %s7, 2
      // Predicated region
      $region33: #{chat_model_forward.16} parent=31 // pred_check
        %p376 = pneg %p62
      $region34: #{chat_model_forward.16} parent=31 // pred_check_branch
        %378 = sbr.rel (%p376) target = $region36
      $region35: #{chat_model_forward.16} parent=31 // pred_region
        %p379 = scmp.lt.s32.totalorder %s13, 1
        %s380 = scalar_select %p379, %s13, 1
        %s381 = smul.addr %s380, 4
        %s382 = scalar_lea.vmem %s1, %s381
      $region36: #{chat_model_forward.16} parent=31 // pred_fallthru
        _
    $region32: #{chat_model_forward.16} parent=5 // pred_fallthru
      _
  $region6: #{chat_model_forward.16} parent=0 // loop_footer
    %s11 = sadd.s32 1, %s7
  $region7: #{chat_model_forward.16} parent=0 // loop_footer_branch
    %6 = sbr.rel target = $region3
  $region8: #{chat_model_forward.16} parent=0 // loop_exit
    _

// kernel: chat_model_forward.18
$region0: #{chat_model_forward.18}
  #allocation0 [shape = 'u32[]', space=smem, size = 0x4, offset = 0x4, fixed_abs, tag = 'smem constant byte address 0x4 - core index']
  #allocation1 [shape = 'u32[72,128]{1,0:T(1,128)}', space=vmem, size = 0x9000, scoped, tag = 'internal scratch']
  %s0 = inlined_call_operand.vmem [shape: bf16[16,32], index: 0, kind: input, shape index: {}]
  %s1 = inlined_call_operand.vmem [shape: f32[1,32], index: 1, kind: input, shape index: {}]
  %s2 = inlined_call_operand.vmem [shape: f32[1,32], index: 2, kind: input, shape index: {}]
  %s3 = inlined_call_operand.vmem [shape: bf16[16,32], index: 3, kind: output, shape index: {}]
  %s4 = sld [smem:[#allocation0]]
  $region22: #{chat_model_forward.18} parent=0
    _
  %s6 = ssub.s32 1, %s4
  %s7 = scalar_select 0, %s6, %s4
  // Predicated region
  $region2: #{chat_model_forward.18} parent=0 // pred_check
    _
  $region3: #{chat_model_forward.18} parent=0 // pred_check_branch
    %9 = sbr.rel (0) target = $region5
  $region4: #{chat_model_forward.18} parent=0 // pred_region
    _
  $region5: #{chat_model_forward.18} parent=0 // pred_fallthru
    _
  // Predicated region
  $region6: #{chat_model_forward.18} parent=0 // pred_check
    _
  $region7: #{chat_model_forward.18} parent=0 // pred_check_branch
    %11 = sbr.rel (0) target = $region9
  $region8: #{chat_model_forward.18} parent=0 // pred_region
    _
  $region9: #{chat_model_forward.18} parent=0 // pred_fallthru
    _
  // Predicated region
  $region10: #{chat_model_forward.18} parent=0 // pred_check
    _
  $region11: #{chat_model_forward.18} parent=0 // pred_check_branch
    %13 = sbr.rel (0) target = $region13
  $region12: #{chat_model_forward.18} parent=0 // pred_region
    _
  $region13: #{chat_model_forward.18} parent=0 // pred_fallthru
    _
  %v14 = vld [vmem:[%s0] sm:$0xf]
  %v15 = vld [vmem:[%s0 + $0x4] sm:$0xf]
  %v16 = vunpack.c.l.bf16 %v14
  %v17 = vunpack.c.l.bf16 %v15
  %vm18 = vcmask 261120
  %v19 = vsel %vm18, %v16, 0.0
  %20 = vadd.xlane.f32.xlu0 %v19
  %v21 = vpop.xlane.xlu0 %20
  %v22 = vsel %vm18, %v17, 0.0
  %23 = vadd.xlane.f32.xlu0 %v22
  %v24 = vpop.xlane.xlu0 %23
  %v25 = vrcp.pop 32.0
  %v26 = vmul.f32 32.0, %v25
  %v27 = vsub.f32 1.0, %v26
  %v28 = vmul.f32 %v25, %v27
  %v29 = vadd.f32 %v25, %v28
  %vm30 = vweird.f32 %v25
  %v31 = vsel %vm30, %v25, %v29
  %v32 = vmul.f32 %v21, %v31
  %v33 = vmul.f32 %v24, %v31
  %v34 = vsub.f32 %v16, %v32
  %v35 = vsub.f32 %v17, %v33
  %v36 = vmul.f32 %v34, %v34
  %v37 = vmul.f32 %v35, %v35
  %v38 = vsel %vm18, %v36, 0.0
  %39 = vadd.xlane.f32.xlu0 %v38
  %v40 = vpop.xlane.xlu0 %39
  %v41 = vsel %vm18, %v37, 0.0
  %42 = vadd.xlane.f32.xlu0 %v41
  %v43 = vpop.xlane.xlu0 %42
  %v44 = vmul.f32 %v40, %v31
  %v45 = vmul.f32 %v43, %v31
  %v46 = vadd.f32 %v44, 1e-12
  %v47 = vadd.f32 %v45, 1e-12
  %v48 = vrsqrt.pop %v46
  %v49 = vmul.f32 %v48, %v46
  %v50 = vmul.f32 %v49, %v48
  %v51 = vmul.f32 0.5, %v50
  %v52 = vsub.f32 1.5, %v51
  %v53 = vmul.f32 %v48, %v52
  %vm54 = vweird.f32 %v46
  %vm55 = vweird.f32 %v48
  %vm56 = vmor %vm54, %vm55
  %v57 = vsel %vm56, %v48, %v53
  %v58 = vrsqrt.pop %v47
  %v59 = vmul.f32 %v58, %v47
  %v60 = vmul.f32 %v59, %v58
  %v61 = vmul.f32 0.5, %v60
  %v62 = vsub.f32 1.5, %v61
  %v63 = vmul.f32 %v58, %v62
  %vm64 = vweird.f32 %v47
  %vm65 = vweird.f32 %v58
  %vm66 = vmor %vm64, %vm65
  %v67 = vsel %vm66, %v58, %v63
  %v68 = vmul.f32 %v34, %v57
  %v69 = vmul.f32 %v35, %v67
  %v70 = vld [vmem:[%s1] sm:$0x1]
  %v72 = vperm.slane %v70, 0
  %v74 = vmul.f32 %v68, %v72
  %v75 = vmul.f32 %v69, %v72
  %v76 = vld [vmem:[%s2] sm:$0x1]
  %v78 = vperm.slane %v76, 0
  %v80 = vadd.f32 %v74, %v78
  %v81 = vadd.f32 %v75, %v78
  %v82 = vpack.c.bf16 %v80, %v80
  %v83 = vpack.c.bf16 %v81, %v81
  %vm84 = vcmask 257024
  %85 = vst.msk [vmem:[%s3] sm:$0xf] %vm84, %v82
  %86 = vst.msk [vmem:[%s3 + $0x4] sm:$0xf] %vm84, %v83
  // Predicated region
  $region14: #{chat_model_forward.18} parent=0 // pred_check
    _
  $region15: #{chat_model_forward.18} parent=0 // pred_check_branch
    %88 = sbr.rel (0) target = $region17
  $region16: #{chat_model_forward.18} parent=0 // pred_region
    _
  $region17: #{chat_model_forward.18} parent=0 // pred_fallthru
    _
  // Predicated region
  $region18: #{chat_model_forward.18} parent=0 // pred_check
    _
  $region19: #{chat_model_forward.18} parent=0 // pred_check_branch
    %90 = sbr.rel (0) target = $region21
  $region20: #{chat_model_forward.18} parent=0 // pred_region
    _
  $region21: #{chat_model_forward.18} parent=0 // pred_fallthru
    _

// kernel: chat_model_forward.27
$region0: #{chat_model_forward.27}
  #allocation0 [shape = 'u32[]', space=smem, size = 0x4, offset = 0x4, fixed_abs, tag = 'smem constant byte address 0x4 - core index']
  #allocation1 [shape = 'u32[72,128]{1,0:T(1,128)}', space=vmem, size = 0x9000, scoped, tag = 'internal scratch']
  #allocation2 [shape = 'f32[2,32]{1,0:T(2,128)}', space=vmem, size = 0x400, scoped, tag = 'scratch operand']
  %s0 = inlined_call_operand.vmem [shape: bf16[2,32], index: 0, kind: input, shape index: {}]
  %s1 = inlined_call_operand.vmem [shape: bf16[32,32], index: 1, kind: input, shape index: {}]
  %s2 = inlined_call_operand.vmem [shape: f32[1,32], index: 2, kind: input, shape index: {}]
  %s3 = inlined_call_operand.hbm [shape: f32[2,32], index: 3, kind: output, shape index: {}]
  %s4 = sld [smem:[#allocation0]]
  $region30: #{chat_model_forward.27} parent=0
    _
  %s6 = ssub.s32 1, %s4
  %s7 = scalar_select 0, %s6, %s4
  $region1: #{chat_model_forward.27} parent=0
    #allocation3 [shape = 'u8[1024]{0}', space=vmem, size = 0x400, scoped, tag = 'output window, operand 0, single buffered']
    #allocation4 [shape = 's32[1]{0}', space=sflag, size = 0x4, scoped, tag = 'scoped memory for chat_model_forward.27']
    %8 = vsyncpa [#allocation4], 0
    // Predicated region
    $region2: #{chat_model_forward.27} parent=1 // pred_check
      _
    $region3: #{chat_model_forward.27} parent=1 // pred_check_branch
      %10 = sbr.rel (0) target = $region5
    $region4: #{chat_model_forward.27} parent=1 // pred_region
      _
    $region5: #{chat_model_forward.27} parent=1 // pred_fallthru
      _
    // Predicated region
    $region6: #{chat_model_forward.27} parent=1 // pred_check
      _
    $region7: #{chat_model_forward.27} parent=1 // pred_check_branch
      %12 = sbr.rel (0) target = $region9
    $region8: #{chat_model_forward.27} parent=1 // pred_region
      _
    $region9: #{chat_model_forward.27} parent=1 // pred_fallthru
      _
    // Predicated region
    $region10: #{chat_model_forward.27} parent=1 // pred_check
      _
    $region11: #{chat_model_forward.27} parent=1 // pred_check_branch
      %14 = sbr.rel (0) target = $region13
    $region12: #{chat_model_forward.27} parent=1 // pred_region
      _
    $region13: #{chat_model_forward.27} parent=1 // pred_fallthru
      _
    %p16 = scmp.eq.s32.totalorder 0, 0
    // Predicated region
    $region14: #{chat_model_forward.27} parent=1 // pred_check
      %p17 = pneg %p16
    $region15: #{chat_model_forward.27} parent=1 // pred_check_branch
      %19 = sbr.rel (%p17) target = $region17
    $region16: #{chat_model_forward.27} parent=1 // pred_region
      %vm20 = vcmask 254976
      %21 = vst.msk [vmem:[#allocation2] sm:$0x3] %vm20, 0.0
    $region17: #{chat_model_forward.27} parent=1 // pred_fallthru
      _
    %v22 = vld [vmem:[#allocation2] sm:$0x3]
    %v23 = vld [vmem:[%s0] sm:$0x1]
    %v24 = vld [vmem:[%s1] sm:$0xf]
    %v25 = vld [vmem:[%s1 + $0x4] sm:$0xf]
    %v26 = vld [vmem:[%s1 + $0x8] sm:$0xf]
    %v27 = vld [vmem:[%s1 + $0xc] sm:$0xf]
    %v32 = vunpack.c.l.b16 %v24
    %v33 = vunpack.c.l.b16 %v25
    %v34 = vunpack.c.l.b16 %v26
    %v35 = vunpack.c.l.b16 %v27
    %v36 = vpack.c.b16 %v33, %v32
    %v37 = vpack.c.b16 %v35, %v34
    %vm40 = vcmask 261120
    %v42 = vsel %vm40, %v23, 0
    %44 = vmatpush.bf16.msra.mxu0 0
    %45 = vmatpush.bf16.msra.mxu0 0
    %46 = vmatpush.bf16.msra.mxu0 0
    %47 = vmatpush.bf16.msra.mxu0 0
    %48 = vmatpush.bf16.msra.mxu0 0
    %49 = vmatpush.bf16.msra.mxu0 0
    %50 = vmatpush.bf16.msra.mxu0 %v37
    %51 = vmatpush.bf16.msra.mxu0 %v36
    %52 = vmatmul.bf16.gmra.mxu0 %v42
    %v53 = vpop.f32.mrf.mxu0
    %v54 = vadd.f32 0.0, %v53
    %v55 = vpop.f32.mrf.mxu0
    %56 = vdwg.mxu0
    %v57 = vadd.f32 %v22, %v54
    %vm58 = vcmask 254976
    %59 = vst.msk [vmem:[#allocation2] sm:$0x3] %vm58, %v57
    // Predicated region
    $region18: #{chat_model_forward.27} parent=1 // pred_check
      %p60 = pneg %p16
    $region19: #{chat_model_forward.27} parent=1 // pred_check_branch
      %62 = sbr.rel (%p60) target = $region21
    $region20: #{chat_model_forward.27} parent=1 // pred_region
      %v63 = vld [vmem:[#allocation2] sm:$0x3]
      %v64 = vld [vmem:[%s2] sm:$0x1]
      %v66 = vperm.slane %v64, 0
      %v68 = vadd.f32 %v63, %v66
      %v69 = vtanh.pop %v68
      %70 = vst.msk [vmem:[#allocation3] sm:$0x3] %vm58, %v69
    $region21: #{chat_model_forward.27} parent=1 // pred_fallthru
      _
    // Predicated region
    $region22: #{chat_model_forward.27} parent=1 // pred_check
      _
    $region23: #{chat_model_forward.27} parent=1 // pred_check_branch
      %72 = sbr.rel (0) target = $region25
    $region24: #{chat_model_forward.27} parent=1 // pred_region
      %74 = vsyncadd [#allocation4], 0
      %s76 = sshll.u32 [#allocation3], 4
      %s77 = int_to_ptr.vmem [resolvable:$true] %s76
      %s78 = sshll.u32 %s3, 4
      %s79 = int_to_ptr.hbm [resolvable:$true] %s78
      %81 = dma.vmem_to_hbm [thread:$0]  %s77, 32, %s79, [#allocation4]
    $region25: #{chat_model_forward.27} parent=1 // pred_fallthru
      _
    // Predicated region
    $region26: #{chat_model_forward.27} parent=1 // pred_check
      _
    $region27: #{chat_model_forward.27} parent=1 // pred_check_branch
      %83 = sbr.rel (0) target = $region29
    $region28: #{chat_model_forward.27} parent=1 // pred_region
      %85 = dma.done [#allocation4], 32
    $region29: #{chat_model_forward.27} parent=1 // pred_fallthru
      _
    %86 = vsyncpa [#allocation4], 1

// kernel: chat_model_forward.19
$region0: #{chat_model_forward.19}
  #allocation0 [shape = 'u32[]', space=smem, size = 0x4, offset = 0x4, fixed_abs, tag = 'smem constant byte address 0x4 - core index']
  #allocation1 [shape = 'u32[72,128]{1,0:T(1,128)}', space=vmem, size = 0x9000, scoped, tag = 'internal scratch']
  #allocation2 [shape = 'f32[16,32]{1,0:T(8,128)}', space=vmem, size = 0x2000, scoped, tag = 'scratch operand']
  %s0 = inlined_call_operand.vmem [shape: bf16[16,32], index: 0, kind: input, shape index: {}, may-alias: {0,5}]
  %s1 = inlined_call_operand.vmem [shape: bf16[32,64], index: 1, kind: input, shape index: {}]
  %s2 = inlined_call_operand.vmem [shape: f32[1,64], index: 2, kind: input, shape index: {}]
  %s3 = inlined_call_operand.vmem [shape: bf16[64,32], index: 3, kind: input, shape index: {}]
  %s4 = inlined_call_operand.vmem [shape: f32[1,32], index: 4, kind: input, shape index: {}]
  %s5 = inlined_call_operand.vmem [shape: bf16[16,32], index: 5, kind: input, shape index: {}, may-alias: {0,5}]
  %s6 = inlined_call_operand.vmem [shape: bf16[16,32], index: 6, kind: output, shape index: {}]
  %s7 = sld [smem:[#allocation0]]
  $region42: #{chat_model_forward.19} parent=0
    _
  %s9 = ssub.s32 1, %s7
  %s10 = scalar_select 0, %s9, %s7
  // Predicated region
  $region2: #{chat_model_forward.19} parent=0 // pred_check
    _
  $region3: #{chat_model_forward.19} parent=0 // pred_check_branch
    %12 = sbr.rel (0) target = $region5
  $region4: #{chat_model_forward.19} parent=0 // pred_region
    _
  $region5: #{chat_model_forward.19} parent=0 // pred_fallthru
    _
  // Predicated region
  $region6: #{chat_model_forward.19} parent=0 // pred_check
    _
  $region7: #{chat_model_forward.19} parent=0 // pred_check_branch
    %14 = sbr.rel (0) target = $region9
  $region8: #{chat_model_forward.19} parent=0 // pred_region
    _
  $region9: #{chat_model_forward.19} parent=0 // pred_fallthru
    _
  // Predicated region
  $region10: #{chat_model_forward.19} parent=0 // pred_check
    _
  $region11: #{chat_model_forward.19} parent=0 // pred_check_branch
    %16 = sbr.rel (0) target = $region13
  $region12: #{chat_model_forward.19} parent=0 // pred_region
    _
  $region13: #{chat_model_forward.19} parent=0 // pred_fallthru
    _
  // Predicated region
  $region14: #{chat_model_forward.19} parent=0 // pred_check
    _
  $region15: #{chat_model_forward.19} parent=0 // pred_check_branch
    %18 = sbr.rel (0) target = $region17
  $region16: #{chat_model_forward.19} parent=0 // pred_region
    _
  $region17: #{chat_model_forward.19} parent=0 // pred_fallthru
    _
  // Predicated region
  $region18: #{chat_model_forward.19} parent=0 // pred_check
    _
  $region19: #{chat_model_forward.19} parent=0 // pred_check_branch
    %20 = sbr.rel (0) target = $region21
  $region20: #{chat_model_forward.19} parent=0 // pred_region
    _
  $region21: #{chat_model_forward.19} parent=0 // pred_fallthru
    _
  // Predicated region
  $region22: #{chat_model_forward.19} parent=0 // pred_check
    _
  $region23: #{chat_model_forward.19} parent=0 // pred_check_branch
    %22 = sbr.rel (0) target = $region25
  $region24: #{chat_model_forward.19} parent=0 // pred_region
    _
  $region25: #{chat_model_forward.19} parent=0 // pred_fallthru
    _
  %p24 = scmp.eq.s32.totalorder 0, 0
  // Predicated region
  $region26: #{chat_model_forward.19} parent=0 // pred_check
    %p25 = pneg %p24
  $region27: #{chat_model_forward.19} parent=0 // pred_check_branch
    %27 = sbr.rel (%p25) target = $region29
  $region28: #{chat_model_forward.19} parent=0 // pred_region
    %vm28 = vcmask 261120
    %29 = vst.msk [vmem:[#allocation2] sm:$0xff] %vm28, 0.0
    %30 = vst.msk [vmem:[#allocation2 + $0x8] sm:$0xff] %vm28, 0.0
  $region29: #{chat_model_forward.19} parent=0 // pred_fallthru
    _
  %v31 = vld [vmem:[%s0] sm:$0xf]
  %v32 = vld [vmem:[%s0 + $0x4] sm:$0xf]
  %v33 = vld [vmem:[%s1] sm:$0xf]
  %v34 = vld [vmem:[%s1 + $0x4] sm:$0xf]
  %v35 = vld [vmem:[%s1 + $0x8] sm:$0xf]
  %v36 = vld [vmem:[%s1 + $0xc] sm:$0xf]
  %v37 = vld [vmem:[%s2] sm:$0x1]
  %v39 = vperm.slane %v37, 0
  %v43 = vunpack.c.l.b16 %v31
  %v44 = vunpack.c.l.b16 %v32
  %v45 = vpack.c.b16 %v44, %v43
  %v50 = vunpack.c.l.b16 %v33
  %v51 = vunpack.c.l.b16 %v34
  %v52 = vunpack.c.l.b16 %v35
  %v53 = vunpack.c.l.b16 %v36
  %v54 = vpack.c.b16 %v51, %v50
  %v55 = vpack.c.b16 %v53, %v52
  %vm58 = vcmask 261120
  %v60 = vsel %vm58, %v45, 0
  %62 = vmatpush.bf16.msra.mxu0 0
  %63 = vmatpush.bf16.msra.mxu0 0
  %64 = vmatpush.bf16.msra.mxu0 0
  %65 = vmatpush.bf16.msra.mxu0 0
  %66 = vmatpush.bf16.msra.mxu0 0
  %67 = vmatpush.bf16.msra.mxu0 0
  %68 = vmatpush.bf16.msra.mxu0 %v55
  %69 = vmatpush.bf16.msra.mxu0 %v54
  %70 = vmatmul.bf16.gmra.mxu0 %v60
  %v71 = vpop.f32.mrf.mxu0
  %v72 = vadd.f32 %v39, %v71
  %v73 = vpop.f32.mrf.mxu0
  %v74 = vadd.f32 %v39, %v73
  %75 = vdwg.mxu0
  %v76 = vmul.f32 %v72, 0.5
  %v77 = vmul.f32 %v74, 0.5
  %v78 = vmul.f32 %v72, 0.044715
  %v79 = vmul.f32 %v74, 0.044715
  %v80 = vmul.f32 %v78, %v72
  %v81 = vmul.f32 %v79, %v74
  %v82 = vmul.f32 %v80, %v72
  %v83 = vmul.f32 %v81, %v74
  %v84 = vadd.f32 %v72, %v82
  %v85 = vadd.f32 %v74, %v83
  %v86 = vmul.f32 %v84, 0.7978846
  %v87 = vmul.f32 %v85, 0.7978846
  %v88 = vtanh.pop %v86
  %v89 = vtanh.pop %v87
  %v90 = vadd.f32 %v88, 1.0
  %v91 = vadd.f32 %v89, 1.0
  %v92 = vmul.f32 %v76, %v90
  %v93 = vmul.f32 %v77, %v91
  %v94 = vld [vmem:[#allocation2] sm:$0xff]
  %v95 = vld [vmem:[#allocation2 + $0x8] sm:$0xff]
  %v96 = vpack.c.bf16 %v93, %v92
  %v97 = vld [vmem:[%s3] sm:$0xf]
  %v98 = vld [vmem:[%s3 + $0x4] sm:$0xf]
  %v99 = vld [vmem:[%s3 + $0x8] sm:$0xf]
  %v100 = vld [vmem:[%s3 + $0xc] sm:$0xf]
  %v101 = vld [vmem:[%s3 + $0x10] sm:$0xf]
  %v102 = vld [vmem:[%s3 + $0x14] sm:$0xf]
  %v103 = vld [vmem:[%s3 + $0x18] sm:$0xf]
  %v104 = vld [vmem:[%s3 + $0x1c] sm:$0xf]
  %v113 = vunpack.c.l.b16 %v97
  %v114 = vunpack.c.l.b16 %v98
  %v115 = vunpack.c.l.b16 %v99
  %v116 = vunpack.c.l.b16 %v100
  %v117 = vunpack.c.l.b16 %v101
  %v118 = vunpack.c.l.b16 %v102
  %v119 = vunpack.c.l.b16 %v103
  %v120 = vunpack.c.l.b16 %v104
  %v121 = vpack.c.b16 %v114, %v113
  %v122 = vpack.c.b16 %v116, %v115
  %v123 = vpack.c.b16 %v118, %v117
  %v124 = vpack.c.b16 %v120, %v119
  %vm129 = vcmask 523264
  %v131 = vsel %vm129, %v96, 0
  %133 = vmatpush.bf16.msra.mxu0 0
  %134 = vmatpush.bf16.msra.mxu0 0
  %135 = vmatpush.bf16.msra.mxu0 0
  %136 = vmatpush.bf16.msra.mxu0 0
  %137 = vmatpush.bf16.msra.mxu0 %v124
  %138 = vmatpush.bf16.msra.mxu0 %v123
  %139 = vmatpush.bf16.msra.mxu0 %v122
  %140 = vmatpush.bf16.msra.mxu0 %v121
  %141 = vmatmul.bf16.gmra.mxu0 %v131
  %v142 = vpop.f32.mrf.mxu0
  %v143 = vadd.f32 0.0, %v142
  %v144 = vpop.f32.mrf.mxu0
  %v145 = vadd.f32 0.0, %v144
  %146 = vdwg.mxu0
  %v147 = vadd.f32 %v94, %v143
  %v148 = vadd.f32 %v95, %v145
  %149 = vst.msk [vmem:[#allocation2] sm:$0xff] %vm58, %v147
  %150 = vst.msk [vmem:[#allocation2 + $0x8] sm:$0xff] %vm58, %v148
  // Predicated region
  $region30: #{chat_model_forward.19} parent=0 // pred_check
    %p151 = pneg %p24
  $region31: #{chat_model_forward.19} parent=0 // pred_check_branch
    %153 = sbr.rel (%p151) target = $region33
  $region32: #{chat_model_forward.19} parent=0 // pred_region
    %v154 = vld [vmem:[#allocation2] sm:$0xff]
    %v155 = vld [vmem:[#allocation2 + $0x8] sm:$0xff]
    %v156 = vld [vmem:[%s4] sm:$0x1]
    %v158 = vperm.slane %v156, 0
    %v160 = vadd.f32 %v154, %v158
    %v161 = vadd.f32 %v155, %v158
    %v162 = vld [vmem:[%s5] sm:$0xf]
    %v163 = vld [vmem:[%s5 + $0x4] sm:$0xf]
    %v164 = vunpack.c.l.bf16 %v162
    %v165 = vunpack.c.l.bf16 %v163
    %v166 = vadd.f32 %v160, %v164
    %v167 = vadd.f32 %v161, %v165
    %v168 = vpack.c.bf16 %v166, %v166
    %v169 = vpack.c.bf16 %v167, %v167
    %vm170 = vcmask 257024
    %171 = vst.msk [vmem:[%s6] sm:$0xf] %vm170, %v168
    %172 = vst.msk [vmem:[%s6 + $0x4] sm:$0xf] %vm170, %v169
  $region33: #{chat_model_forward.19} parent=0 // pred_fallthru
    _
  // Predicated region
  $region34: #{chat_model_forward.19} parent=0 // pred_check
    _
  $region35: #{chat_model_forward.19} parent=0 // pred_check_branch
    %174 = sbr.rel (0) target = $region37
  $region36: #{chat_model_forward.19} parent=0 // pred_region
    _
  $region37: #{chat_model_forward.19} parent=0 // pred_fallthru
    _
  // Predicated region
  $region38: #{chat_model_forward.19} parent=0 // pred_check
    _
  $region39: #{chat_model_forward.19} parent=0 // pred_check_branch
    %176 = sbr.rel (0) target = $region41
  $region40: #{chat_model_forward.19} parent=0 // pred_region
    _
  $region41: #{chat_model_forward.19} parent=0 // pred_fallthru
    _

</llo_original>
